<compile_context>
chip_gen: v7x
topology: tpu7x:2x2x1
jax: 0.10.0
libtpu: 0.0.40
codegen_flags: <defaults>
</compile_context>

<pallas_src>
import jax
import jax.numpy as jnp
from jax.experimental import pallas as pl
from jax.experimental.pallas import tpu as pltpu

INPUT_DIM = 6                       # model output features (PyTorch "input_dim")
LATENT_DIM = 4
OUTPUT_DIM = 2
CAT_DIM = OUTPUT_DIM + LATENT_DIM   # 6
HIDDEN = (256, 512, 256)

IN_PAD = 8                          # fused [y, noise] padded 6 -> 8 lanes
OUT_PAD = 128                       # lane-dense output (6 -> 128 lanes)
MAX_TILE_B = 2048                   # batch tile cap (multiple of 256)


def _round_up(x, m):
    return (x + m - 1) // m * m


def _choose_tile(b):
    """Batch tile (multiple of 256) and padded batch size."""
    b256 = _round_up(max(b, 1), 256)
    tile = min(MAX_TILE_B, b256)
    # v7x has 2 TensorCores; guarantee >= 2 grid steps whenever there are at
    # least two 256-row tiles of work so the "parallel" axis feeds both cores.
    if tile == b256 and b256 >= 512:
        tile = b256 // 2 if b256 % 512 == 0 else 256
    b_pad = _round_up(b256, tile)
    return tile, b_pad


def _inverse_model_kernel(x_ref, w1_ref, b1_ref, w2_ref, b2_ref,
                          w3_ref, b3_ref, w4_ref, b4_ref, o_ref):
    # Activations in bf16, accumulation in f32 on the MXU.
    x = x_ref[...].astype(jnp.bfloat16)

    # Layer 1: fused/padded (tile_b, 8) @ (8, 256)
    h = jnp.dot(x, w1_ref[...], preferred_element_type=jnp.float32) + b1_ref[...]
    h = jnp.maximum(h, 0.0).astype(jnp.bfloat16)

    # Layer 2: 256 -> 512
    h = jnp.dot(h, w2_ref[...], preferred_element_type=jnp.float32) + b2_ref[...]
    h = jnp.maximum(h, 0.0).astype(jnp.bfloat16)

    # Layer 3: 512 -> 256
    h = jnp.dot(h, w3_ref[...], preferred_element_type=jnp.float32) + b3_ref[...]
    h = jnp.maximum(h, 0.0).astype(jnp.bfloat16)

    # Layer 4: 256 -> 128 (zero-padded from 6, lane-dense store; no activation)
    out = jnp.dot(h, w4_ref[...], preferred_element_type=jnp.float32) + b4_ref[...]
    o_ref[...] = out.astype(o_ref.dtype)


def inverse_model_forward(y, noise, params):
    """y: (B, OUTPUT_DIM), noise: (B, LATENT_DIM) -> (B, INPUT_DIM)."""
    w1, b1, w2, b2, w3, b3, w4, b4 = params

    B = y.shape[0]
    tile_b, b_pad = _choose_tile(B)

    # Fuse the torch.cat and the lane padding into one concat; row-pad only if
    # needed (avoids an extra full HBM pass over the inputs when B is aligned).
    x = jnp.concatenate(
        [y.astype(jnp.float32), noise.astype(jnp.float32),
         jnp.zeros((B, IN_PAD - CAT_DIM), jnp.float32)], axis=1)
    if b_pad != B:
        x = jnp.pad(x, ((0, b_pad - B), (0, 0)))

    grid = (b_pad // tile_b,)

    def resident(shape):
        # Constant block index -> weights/biases stay in VMEM across the grid.
        return pl.BlockSpec(shape, lambda i: (0, 0))

    weight_bytes = (w1.size * 2 + w2.size * 2 + w3.size * 2 + w4.size * 2
                    + (b1.size + b2.size + b3.size + b4.size) * 4)
    cost = pl.CostEstimate(
        flops=2 * b_pad * (IN_PAD * HIDDEN[0] + HIDDEN[0] * HIDDEN[1]
                           + HIDDEN[1] * HIDDEN[2] + HIDDEN[2] * OUT_PAD),
        transcendentals=0,
        bytes_accessed=weight_bytes + b_pad * IN_PAD * 4 + b_pad * OUT_PAD * 4)

    out = pl.pallas_call(
        _inverse_model_kernel,
        out_shape=jax.ShapeDtypeStruct((b_pad, OUT_PAD), jnp.float32),
        grid=grid,
        in_specs=[
            pl.BlockSpec((tile_b, IN_PAD), lambda i: (i, 0)),
            resident(w1.shape), resident(b1.shape),
            resident(w2.shape), resident(b2.shape),
            resident(w3.shape), resident(b3.shape),
            resident(w4.shape), resident(b4.shape),
        ],
        out_specs=pl.BlockSpec((tile_b, OUT_PAD), lambda i: (i, 0)),
        compiler_params=pltpu.CompilerParams(
            dimension_semantics=("parallel",),
            vmem_limit_bytes=32 << 20),
        cost_estimate=cost,
    )(x, w1, b1, w2, b2, w3, b3, w4, b4)

    # Slice off both the padded rows and the padded output lanes.
    return out[:B, :INPUT_DIM]


def init_params(key):
    """nn.Linear-style init: uniform(-1/sqrt(fan_in), 1/sqrt(fan_in)).

    Weights stored (in_features, out_features) in bf16; biases (1, out) f32.
    W1 is zero-padded on its input rows (6 -> 8); W4/b4 are zero-padded on the
    output lanes (6 -> 128) for a lane-dense store."""
    dims = [CAT_DIM, *HIDDEN, INPUT_DIM]  # [6, 256, 512, 256, 6]
    raw = []
    for i in range(len(dims) - 1):
        fan_in, fan_out = dims[i], dims[i + 1]
        key, kw, kb = jax.random.split(key, 3)
        bound = 1.0 / (fan_in ** 0.5)
        w = jax.random.uniform(kw, (fan_in, fan_out), jnp.float32, -bound, bound)
        b = jax.random.uniform(kb, (1, fan_out), jnp.float32, -bound, bound)
        raw.append((w, b))

    (w1, b1), (w2, b2), (w3, b3), (w4, b4) = raw
    bf = jnp.bfloat16
    w1p = jnp.zeros((IN_PAD, HIDDEN[0]), jnp.float32).at[:CAT_DIM].set(w1).astype(bf)
    w4p = jnp.zeros((HIDDEN[2], OUT_PAD), jnp.float32).at[:, :INPUT_DIM].set(w4).astype(bf)
    b4p = jnp.zeros((1, OUT_PAD), jnp.float32).at[:, :INPUT_DIM].set(b4)
    return (w1p, b1, w2.astype(bf), b2, w3.astype(bf), b3, w4p, b4p)


def reference_forward(y, noise, params):
    """Pure-JAX reference using the exact same precision path as the kernel."""
    w1, b1, w2, b2, w3, b3, w4, b4 = params
    x = jnp.concatenate([y, noise], axis=1).astype(jnp.bfloat16)
    h = jnp.dot(x, w1[:CAT_DIM], preferred_element_type=jnp.float32) + b1
    h = jnp.maximum(h, 0.0).astype(jnp.bfloat16)
    h = jnp.dot(h, w2, preferred_element_type=jnp.float32) + b2
    h = jnp.maximum(h, 0.0).astype(jnp.bfloat16)
    h = jnp.dot(h, w3, preferred_element_type=jnp.float32) + b3
    h = jnp.maximum(h, 0.0).astype(jnp.bfloat16)
    out = (jnp.dot(h, w4[:, :INPUT_DIM], preferred_element_type=jnp.float32)
           + b4[:, :INPUT_DIM])
    return out


if __name__ == "__main__":
    key = jax.random.PRNGKey(0)
    k_params, k_y, k_noise = jax.random.split(key, 3)

    B = 8
    params = init_params(k_params)
    y = jax.random.normal(k_y, (B, OUTPUT_DIM), jnp.float32)
    noise = jax.random.normal(k_noise, (B, LATENT_DIM), jnp.float32)

    fwd = jax.jit(inverse_model_forward)
    out = jax.block_until_ready(fwd(y, noise, params))

    ref = reference_forward(y, noise, params)
    assert out.shape == (B, INPUT_DIM)
    assert jnp.allclose(out, ref, atol=5e-3, rtol=5e-3), "mismatch vs JAX reference"

    print("KERNEL_OK")
</pallas_src>

<mosaic_0001>
module attributes {stable_mosaic.version = 11 : i64} {
  func.func @_inverse_model_kernel(%arg0: i32, %arg1: memref<256x8xf32, #tpu.memory_space<vmem>>, %arg2: memref<8x256xbf16, #tpu.memory_space<vmem>>, %arg3: memref<1x256xf32, #tpu.memory_space<vmem>>, %arg4: memref<256x512xbf16, #tpu.memory_space<vmem>>, %arg5: memref<1x512xf32, #tpu.memory_space<vmem>>, %arg6: memref<512x256xbf16, #tpu.memory_space<vmem>>, %arg7: memref<1x256xf32, #tpu.memory_space<vmem>>, %arg8: memref<256x128xbf16, #tpu.memory_space<vmem>>, %arg9: memref<1x128xf32, #tpu.memory_space<vmem>>, %arg10: memref<256x128xf32, #tpu.memory_space<vmem>>) attributes {dimension_semantics = [#tpu.dimension_semantics<parallel>], iteration_bounds = array<i64: 1>, scalar_prefetch = 0 : i64, scratch_operands = 0 : i64, tpu.core_type = #tpu.core_type<tc>, window_params = [{transform_indices = @transform_0, window_bounds = array<i64: 256, 8>}, {pipeline_mode = #tpu.pipeline_mode<synchronous>, transform_indices = @transform_1, window_bounds = array<i64: 8, 256>}, {pipeline_mode = #tpu.pipeline_mode<synchronous>, transform_indices = @transform_2, window_bounds = array<i64: 1, 256>}, {pipeline_mode = #tpu.pipeline_mode<synchronous>, transform_indices = @transform_3, window_bounds = array<i64: 256, 512>}, {pipeline_mode = #tpu.pipeline_mode<synchronous>, transform_indices = @transform_4, window_bounds = array<i64: 1, 512>}, {pipeline_mode = #tpu.pipeline_mode<synchronous>, transform_indices = @transform_5, window_bounds = array<i64: 512, 256>}, {pipeline_mode = #tpu.pipeline_mode<synchronous>, transform_indices = @transform_6, window_bounds = array<i64: 1, 256>}, {pipeline_mode = #tpu.pipeline_mode<synchronous>, transform_indices = @transform_7, window_bounds = array<i64: 256, 128>}, {pipeline_mode = #tpu.pipeline_mode<synchronous>, transform_indices = @transform_8, window_bounds = array<i64: 1, 128>}, {transform_indices = @transform_9, window_bounds = array<i64: 256, 128>}]} {
    %c0 = arith.constant 0 : index
    %c0_0 = arith.constant 0 : index
    %0 = vector.load %arg1[%c0, %c0_0] : memref<256x8xf32, #tpu.memory_space<vmem>>, vector<256x8xf32>
    %1 = arith.truncf %0 : vector<256x8xf32> to vector<256x8xbf16>
    %c0_1 = arith.constant 0 : index
    %c0_2 = arith.constant 0 : index
    %2 = vector.load %arg2[%c0_1, %c0_2] : memref<8x256xbf16, #tpu.memory_space<vmem>>, vector<8x256xbf16>
    %cst = arith.constant dense<0.000000e+00> : vector<256x256xf32>
    %3 = tpu.matmul %1, %2, %cst {dimension_numbers = #tpu.dot_dimension_numbers<[1], [0], [0], [1], [0, 0, 1, 1], [], []>} : vector<256x8xbf16>, vector<8x256xbf16>, vector<256x256xf32> -> vector<256x256xf32>
    %c0_3 = arith.constant 0 : index
    %c0_4 = arith.constant 0 : index
    %4 = vector.load %arg3[%c0_3, %c0_4] : memref<1x256xf32, #tpu.memory_space<vmem>>, vector<1x256xf32>
    %5 = vector.broadcast %4 : vector<1x256xf32> to vector<256x256xf32>
    %6 = arith.addf %3, %5 : vector<256x256xf32>
    %cst_5 = arith.constant 0.000000e+00 : f32
    %7 = vector.broadcast %cst_5 : f32 to vector<256x256xf32>
    %8 = arith.maximumf %6, %7 : vector<256x256xf32>
    %9 = arith.truncf %8 : vector<256x256xf32> to vector<256x256xbf16>
    %c0_6 = arith.constant 0 : index
    %c0_7 = arith.constant 0 : index
    %10 = vector.load %arg4[%c0_6, %c0_7] : memref<256x512xbf16, #tpu.memory_space<vmem>>, vector<256x512xbf16>
    %cst_8 = arith.constant dense<0.000000e+00> : vector<256x512xf32>
    %11 = tpu.matmul %9, %10, %cst_8 {dimension_numbers = #tpu.dot_dimension_numbers<[1], [0], [0], [1], [0, 0, 1, 1], [], []>} : vector<256x256xbf16>, vector<256x512xbf16>, vector<256x512xf32> -> vector<256x512xf32>
    %c0_9 = arith.constant 0 : index
    %c0_10 = arith.constant 0 : index
    %12 = vector.load %arg5[%c0_9, %c0_10] : memref<1x512xf32, #tpu.memory_space<vmem>>, vector<1x512xf32>
    %13 = vector.broadcast %12 : vector<1x512xf32> to vector<256x512xf32>
    %14 = arith.addf %11, %13 : vector<256x512xf32>
    %cst_11 = arith.constant 0.000000e+00 : f32
    %15 = vector.broadcast %cst_11 : f32 to vector<256x512xf32>
    %16 = arith.maximumf %14, %15 : vector<256x512xf32>
    %17 = arith.truncf %16 : vector<256x512xf32> to vector<256x512xbf16>
    %c0_12 = arith.constant 0 : index
    %c0_13 = arith.constant 0 : index
    %18 = vector.load %arg6[%c0_12, %c0_13] : memref<512x256xbf16, #tpu.memory_space<vmem>>, vector<512x256xbf16>
    %cst_14 = arith.constant dense<0.000000e+00> : vector<256x256xf32>
    %19 = tpu.matmul %17, %18, %cst_14 {dimension_numbers = #tpu.dot_dimension_numbers<[1], [0], [0], [1], [0, 0, 1, 1], [], []>} : vector<256x512xbf16>, vector<512x256xbf16>, vector<256x256xf32> -> vector<256x256xf32>
    %c0_15 = arith.constant 0 : index
    %c0_16 = arith.constant 0 : index
    %20 = vector.load %arg7[%c0_15, %c0_16] : memref<1x256xf32, #tpu.memory_space<vmem>>, vector<1x256xf32>
    %21 = vector.broadcast %20 : vector<1x256xf32> to vector<256x256xf32>
    %22 = arith.addf %19, %21 : vector<256x256xf32>
    %cst_17 = arith.constant 0.000000e+00 : f32
    %23 = vector.broadcast %cst_17 : f32 to vector<256x256xf32>
    %24 = arith.maximumf %22, %23 : vector<256x256xf32>
    %25 = arith.truncf %24 : vector<256x256xf32> to vector<256x256xbf16>
    %c0_18 = arith.constant 0 : index
    %c0_19 = arith.constant 0 : index
    %26 = vector.load %arg8[%c0_18, %c0_19] : memref<256x128xbf16, #tpu.memory_space<vmem>>, vector<256x128xbf16>
    %cst_20 = arith.constant dense<0.000000e+00> : vector<256x128xf32>
    %27 = tpu.matmul %25, %26, %cst_20 {dimension_numbers = #tpu.dot_dimension_numbers<[1], [0], [0], [1], [0, 0, 1, 1], [], []>} : vector<256x256xbf16>, vector<256x128xbf16>, vector<256x128xf32> -> vector<256x128xf32>
    %c0_21 = arith.constant 0 : index
    %c0_22 = arith.constant 0 : index
    %28 = vector.load %arg9[%c0_21, %c0_22] : memref<1x128xf32, #tpu.memory_space<vmem>>, vector<1x128xf32>
    %29 = vector.broadcast %28 : vector<1x128xf32> to vector<256x128xf32>
    %30 = arith.addf %27, %29 : vector<256x128xf32>
    %c0_23 = arith.constant 0 : index
    %c0_24 = arith.constant 0 : index
    %31 = vector.load %arg10[%c0_23, %c0_24] : memref<256x128xf32, #tpu.memory_space<vmem>>, vector<256x128xf32>
    tpu.vector_store %arg10[%c0_23, %c0_24], %30 {strides = array<i32>} : memref<256x128xf32, #tpu.memory_space<vmem>>, vector<256x128xf32>,
    return
  }
  func.func @transform_0(%arg0: i32) -> (i32, i32) {
    %c0_i32 = arith.constant 0 : i32
    %c0_i32_0 = arith.constant 0 : i32
    return %arg0, %c0_i32 : i32, i32
  }
  func.func @transform_1(%arg0: i32) -> (i32, i32) {
    %c0_i32 = arith.constant 0 : i32
    %c0_i32_0 = arith.constant 0 : i32
    %c0_i32_1 = arith.constant 0 : i32
    return %c0_i32, %c0_i32_0 : i32, i32
  }
  func.func @transform_2(%arg0: i32) -> (i32, i32) {
    %c0_i32 = arith.constant 0 : i32
    %c0_i32_0 = arith.constant 0 : i32
    %c0_i32_1 = arith.constant 0 : i32
    return %c0_i32, %c0_i32_0 : i32, i32
  }
  func.func @transform_3(%arg0: i32) -> (i32, i32) {
    %c0_i32 = arith.constant 0 : i32
    %c0_i32_0 = arith.constant 0 : i32
    %c0_i32_1 = arith.constant 0 : i32
    return %c0_i32, %c0_i32_0 : i32, i32
  }
  func.func @transform_4(%arg0: i32) -> (i32, i32) {
    %c0_i32 = arith.constant 0 : i32
    %c0_i32_0 = arith.constant 0 : i32
    %c0_i32_1 = arith.constant 0 : i32
    return %c0_i32, %c0_i32_0 : i32, i32
  }
  func.func @transform_5(%arg0: i32) -> (i32, i32) {
    %c0_i32 = arith.constant 0 : i32
    %c0_i32_0 = arith.constant 0 : i32
    %c0_i32_1 = arith.constant 0 : i32
    return %c0_i32, %c0_i32_0 : i32, i32
  }
  func.func @transform_6(%arg0: i32) -> (i32, i32) {
    %c0_i32 = arith.constant 0 : i32
    %c0_i32_0 = arith.constant 0 : i32
    %c0_i32_1 = arith.constant 0 : i32
    return %c0_i32, %c0_i32_0 : i32, i32
  }
  func.func @transform_7(%arg0: i32) -> (i32, i32) {
    %c0_i32 = arith.constant 0 : i32
    %c0_i32_0 = arith.constant 0 : i32
    %c0_i32_1 = arith.constant 0 : i32
    return %c0_i32, %c0_i32_0 : i32, i32
  }
  func.func @transform_8(%arg0: i32) -> (i32, i32) {
    %c0_i32 = arith.constant 0 : i32
    %c0_i32_0 = arith.constant 0 : i32
    %c0_i32_1 = arith.constant 0 : i32
    return %c0_i32, %c0_i32_0 : i32, i32
  }
  func.func @transform_9(%arg0: i32) -> (i32, i32) {
    %c0_i32 = arith.constant 0 : i32
    %c0_i32_0 = arith.constant 0 : i32
    return %arg0, %c0_i32 : i32, i32
  }
}

</mosaic_0001>

<llo_original>
// kernel: inverse_model_forward.1
$region0: #{inverse_model_forward.1}
  #allocation0 [shape = 'u32[]', space=smem, size = 0x4, offset = 0x4, fixed_abs, tag = 'smem constant byte address 0x4 - core index']
  #allocation1 [shape = 'u32[144,128]{1,0:T(1,128)}', space=vmem, size = 0x12000, scoped, tag = 'internal scratch']
  %s0 = inlined_call_operand.vmem [shape: f32[256,8], index: 0, kind: input, shape index: {}]
  %s1 = inlined_call_operand.vmem [shape: bf16[8,256], index: 1, kind: input, shape index: {}]
  %s2 = inlined_call_operand.vmem [shape: f32[1,256], index: 2, kind: input, shape index: {}]
  %s3 = inlined_call_operand.hbm [shape: bf16[256,512], index: 3, kind: input, shape index: {}]
  %s4 = inlined_call_operand.vmem [shape: f32[1,512], index: 4, kind: input, shape index: {}]
  %s5 = inlined_call_operand.hbm [shape: bf16[512,256], index: 5, kind: input, shape index: {}]
  %s6 = inlined_call_operand.vmem [shape: f32[1,256], index: 6, kind: input, shape index: {}]
  %s7 = inlined_call_operand.vmem [shape: bf16[256,128], index: 7, kind: input, shape index: {}]
  %s8 = inlined_call_operand.vmem [shape: f32[1,128], index: 8, kind: input, shape index: {}]
  %s9 = inlined_call_operand.vmem [shape: f32[256,128], index: 9, kind: output, shape index: {}]
  %s10 = sld [smem:[#allocation0]]
  $region54: #{inverse_model_forward.1} parent=0
    _
  %s12 = ssub.s32 1, %s10
  %s13 = scalar_select 0, %s12, %s10
  $region1: #{inverse_model_forward.1} parent=0
    #allocation2 [shape = 'u8[262144]{0}', space=vmem, size = 0x40000, scoped, tag = 'input window, operand 3, single buffered']
    #allocation3 [shape = 's32[1]{0}', space=sflag, size = 0x4, scoped, tag = 'scoped memory for inverse_model_forward.1']
    #allocation4 [shape = 'u8[262144]{0}', space=vmem, size = 0x40000, scoped, tag = 'input window, operand 5, single buffered']
    #allocation5 [shape = 's32[1]{0}', space=sflag, size = 0x4, scoped, tag = 'scoped memory for inverse_model_forward.1']
    %14 = vsyncpa [#allocation3], 0
    %15 = vsyncpa [#allocation5], 0
    // Predicated region
    $region2: #{inverse_model_forward.1} parent=1 // pred_check
      _
    $region3: #{inverse_model_forward.1} parent=1 // pred_check_branch
      %17 = sbr.rel (0) target = $region5
    $region4: #{inverse_model_forward.1} parent=1 // pred_region
      _
    $region5: #{inverse_model_forward.1} parent=1 // pred_fallthru
      _
    // Predicated region
    $region6: #{inverse_model_forward.1} parent=1 // pred_check
      _
    $region7: #{inverse_model_forward.1} parent=1 // pred_check_branch
      %19 = sbr.rel (0) target = $region9
    $region8: #{inverse_model_forward.1} parent=1 // pred_region
      _
    $region9: #{inverse_model_forward.1} parent=1 // pred_fallthru
      _
    // Predicated region
    $region10: #{inverse_model_forward.1} parent=1 // pred_check
      _
    $region11: #{inverse_model_forward.1} parent=1 // pred_check_branch
      %21 = sbr.rel (0) target = $region13
    $region12: #{inverse_model_forward.1} parent=1 // pred_region
      _
    $region13: #{inverse_model_forward.1} parent=1 // pred_fallthru
      _
    // Predicated region
    $region14: #{inverse_model_forward.1} parent=1 // pred_check
      _
    $region15: #{inverse_model_forward.1} parent=1 // pred_check_branch
      %23 = sbr.rel (0) target = $region17
    $region16: #{inverse_model_forward.1} parent=1 // pred_region
      %s25 = ssub.s32 8192, 8192
      %26 = vsyncadd [#allocation3], %s25
      %s27 = sshll.u32 [#allocation2], 4
      %s28 = int_to_ptr.vmem [resolvable:$true] %s27
      %33 = dma.hbm_to_vmem [thread:$0]  %s3, 8192, %s28, [#allocation3], 256, 256, 16
    $region17: #{inverse_model_forward.1} parent=1 // pred_fallthru
      _
    // Predicated region
    $region18: #{inverse_model_forward.1} parent=1 // pred_check
      _
    $region19: #{inverse_model_forward.1} parent=1 // pred_check_branch
      %35 = sbr.rel (0) target = $region21
    $region20: #{inverse_model_forward.1} parent=1 // pred_region
      _
    $region21: #{inverse_model_forward.1} parent=1 // pred_fallthru
      _
    // Predicated region
    $region22: #{inverse_model_forward.1} parent=1 // pred_check
      _
    $region23: #{inverse_model_forward.1} parent=1 // pred_check_branch
      %37 = sbr.rel (0) target = $region25
    $region24: #{inverse_model_forward.1} parent=1 // pred_region
      %s39 = ssub.s32 8192, 8192
      %40 = vsyncadd [#allocation5], %s39
      %s41 = sshll.u32 [#allocation4], 4
      %s42 = int_to_ptr.vmem [resolvable:$true] %s41
      %47 = dma.hbm_to_vmem [thread:$0]  %s5, 8192, %s42, [#allocation5], 128, 128, 8
    $region25: #{inverse_model_forward.1} parent=1 // pred_fallthru
      _
    // Predicated region
    $region26: #{inverse_model_forward.1} parent=1 // pred_check
      _
    $region27: #{inverse_model_forward.1} parent=1 // pred_check_branch
      %49 = sbr.rel (0) target = $region29
    $region28: #{inverse_model_forward.1} parent=1 // pred_region
      _
    $region29: #{inverse_model_forward.1} parent=1 // pred_fallthru
      _
    // Predicated region
    $region30: #{inverse_model_forward.1} parent=1 // pred_check
      _
    $region31: #{inverse_model_forward.1} parent=1 // pred_check_branch
      %51 = sbr.rel (0) target = $region33
    $region32: #{inverse_model_forward.1} parent=1 // pred_region
      _
    $region33: #{inverse_model_forward.1} parent=1 // pred_fallthru
      _
    // Predicated region
    $region34: #{inverse_model_forward.1} parent=1 // pred_check
      _
    $region35: #{inverse_model_forward.1} parent=1 // pred_check_branch
      %53 = sbr.rel (0) target = $region37
    $region36: #{inverse_model_forward.1} parent=1 // pred_region
      _
    $region37: #{inverse_model_forward.1} parent=1 // pred_fallthru
      _
    // Predicated region
    $region38: #{inverse_model_forward.1} parent=1 // pred_check
      _
    $region39: #{inverse_model_forward.1} parent=1 // pred_check_branch
      %55 = sbr.rel (0) target = $region41
    $region40: #{inverse_model_forward.1} parent=1 // pred_region
      %56 = dma.done [#allocation3], 8192
    $region41: #{inverse_model_forward.1} parent=1 // pred_fallthru
      _
    // Predicated region
    $region42: #{inverse_model_forward.1} parent=1 // pred_check
      _
    $region43: #{inverse_model_forward.1} parent=1 // pred_check_branch
      %58 = sbr.rel (0) target = $region45
    $region44: #{inverse_model_forward.1} parent=1 // pred_region
      %59 = dma.done [#allocation5], 8192
    $region45: #{inverse_model_forward.1} parent=1 // pred_fallthru
      _
    %v61 = vld [vmem:[%s0] sm:$0xff]
    %v62 = vld [vmem:[%s0 + $0x8] sm:$0xff]
    %v63 = vld [vmem:[%s0 + $0x10] sm:$0xff]
    %v64 = vld [vmem:[%s0 + $0x18] sm:$0xff]
    %v65 = vld [vmem:[%s0 + $0x20] sm:$0xff]
    %v66 = vld [vmem:[%s0 + $0x28] sm:$0xff]
    %v67 = vld [vmem:[%s0 + $0x30] sm:$0xff]
    %v68 = vld [vmem:[%s0 + $0x38] sm:$0xff]
    %v69 = vld [vmem:[%s0 + $0x40] sm:$0xff]
    %v70 = vld [vmem:[%s0 + $0x48] sm:$0xff]
    %v71 = vld [vmem:[%s0 + $0x50] sm:$0xff]
    %v72 = vld [vmem:[%s0 + $0x58] sm:$0xff]
    %v73 = vld [vmem:[%s0 + $0x60] sm:$0xff]
    %v74 = vld [vmem:[%s0 + $0x68] sm:$0xff]
    %v75 = vld [vmem:[%s0 + $0x70] sm:$0xff]
    %v76 = vld [vmem:[%s0 + $0x78] sm:$0xff]
    %v77 = vld [vmem:[%s0 + $0x80] sm:$0xff]
    %v78 = vld [vmem:[%s0 + $0x88] sm:$0xff]
    %v79 = vld [vmem:[%s0 + $0x90] sm:$0xff]
    %v80 = vld [vmem:[%s0 + $0x98] sm:$0xff]
    %v81 = vld [vmem:[%s0 + $0xa0] sm:$0xff]
    %v82 = vld [vmem:[%s0 + $0xa8] sm:$0xff]
    %v83 = vld [vmem:[%s0 + $0xb0] sm:$0xff]
    %v84 = vld [vmem:[%s0 + $0xb8] sm:$0xff]
    %v85 = vld [vmem:[%s0 + $0xc0] sm:$0xff]
    %v86 = vld [vmem:[%s0 + $0xc8] sm:$0xff]
    %v87 = vld [vmem:[%s0 + $0xd0] sm:$0xff]
    %v88 = vld [vmem:[%s0 + $0xd8] sm:$0xff]
    %v89 = vld [vmem:[%s0 + $0xe0] sm:$0xff]
    %v90 = vld [vmem:[%s0 + $0xe8] sm:$0xff]
    %v91 = vld [vmem:[%s0 + $0xf0] sm:$0xff]
    %v92 = vld [vmem:[%s0 + $0xf8] sm:$0xff]
    %v93 = vpack.c.bf16 %v62, %v61
    %v94 = vpack.c.bf16 %v64, %v63
    %v95 = vpack.c.bf16 %v66, %v65
    %v96 = vpack.c.bf16 %v68, %v67
    %v97 = vpack.c.bf16 %v70, %v69
    %v98 = vpack.c.bf16 %v72, %v71
    %v99 = vpack.c.bf16 %v74, %v73
    %v100 = vpack.c.bf16 %v76, %v75
    %v101 = vpack.c.bf16 %v78, %v77
    %v102 = vpack.c.bf16 %v80, %v79
    %v103 = vpack.c.bf16 %v82, %v81
    %v104 = vpack.c.bf16 %v84, %v83
    %v105 = vpack.c.bf16 %v86, %v85
    %v106 = vpack.c.bf16 %v88, %v87
    %v107 = vpack.c.bf16 %v90, %v89
    %v108 = vpack.c.bf16 %v92, %v91
    %v109 = vld [vmem:[%s1] sm:$0xff]
    %v110 = vld [vmem:[%s2] sm:$0x3]
    %v112 = vlaneseq
    %v113 = vshrl.u32 %v112, 7
    %v114 = vsub.s32 0, %v113
    %v115 = vrot.slane %v110, %v114
    %v116 = vlaneseq
    %v117 = vshrl.u32 %v116, 7
    %v118 = vsub.s32 1, %v117
    %v119 = vrot.slane %v110, %v118
    %v123 = vunpack.c.l.b16 %v109
    %v124 = vunpack.c.h.b16 %v109
    %v125 = vpack.c.b16 %v123, %v123
    %v126 = vpack.c.b16 %v124, %v124
    %vm127 = vcmask 64512
    %v129 = vsel %vm127, %v93, 0
    %v132 = vsel %vm127, %v94, 0
    %v135 = vsel %vm127, %v95, 0
    %v138 = vsel %vm127, %v96, 0
    %v141 = vsel %vm127, %v97, 0
    %v144 = vsel %vm127, %v98, 0
    %v147 = vsel %vm127, %v99, 0
    %v150 = vsel %vm127, %v100, 0
    %v153 = vsel %vm127, %v101, 0
    %v156 = vsel %vm127, %v102, 0
    %v159 = vsel %vm127, %v103, 0
    %v162 = vsel %vm127, %v104, 0
    %v165 = vsel %vm127, %v105, 0
    %v168 = vsel %vm127, %v106, 0
    %v171 = vsel %vm127, %v107, 0
    %v174 = vsel %vm127, %v108, 0
    %vm176 = vcmask 1043456
    %v178 = vsel %vm176, %v125, 0
    %v181 = vsel %vm176, %v126, 0
    %183 = vmatprep.subr.bf16.mxu0 %v181
    %184 = vmatpush1.bf16.msra.mxu0 %v178
    %185 = vmatprep.subr.bf16.mxu0 0
    %186 = vmatpush1.bf16.msra.mxu0 0
    %187 = vmatprep.subr.bf16.mxu0 0
    %188 = vmatpush1.bf16.msra.mxu0 0
    %189 = vmatprep.subr.bf16.mxu0 0
    %190 = vmatpush1.bf16.msra.mxu0 0
    %191 = vmatprep.subr.bf16.mxu0 0
    %192 = vmatpush1.bf16.msra.mxu0 0
    %193 = vmatprep.subr.bf16.mxu0 0
    %194 = vmatpush1.bf16.msra.mxu0 0
    %195 = vmatprep.subr.bf16.mxu0 0
    %196 = vmatpush1.bf16.msra.mxu0 0
    %197 = vmatprep.subr.bf16.mxu0 0
    %198 = vmatpush1.bf16.msra.mxu0 0
    %199 = vmatprep.subr.bf16.mxu0 0
    %200 = vmatpush1.bf16.msra.mxu0 0
    %201 = vmatprep.subr.bf16.mxu0 0
    %202 = vmatpush1.bf16.msra.mxu0 0
    %203 = vmatprep.subr.bf16.mxu0 0
    %204 = vmatpush1.bf16.msra.mxu0 0
    %205 = vmatprep.subr.bf16.mxu0 0
    %206 = vmatpush1.bf16.msra.mxu0 0
    %207 = vmatprep.subr.bf16.mxu0 0
    %208 = vmatpush1.bf16.msra.mxu0 0
    %209 = vmatprep.subr.bf16.mxu0 0
    %210 = vmatpush1.bf16.msra.mxu0 0
    %211 = vmatprep.subr.bf16.mxu0 0
    %212 = vmatpush1.bf16.msra.mxu0 0
    %213 = vmatprep.subr.bf16.mxu0 0
    %214 = vmatpush1.bf16.msra.mxu0 0
    %215 = vmatprep.mubr.bf16.mxu0 0
    %216 = vmatmul.mubr.bf16.gmra.mrb[0].mxu0 %v129
    %v217 = vpop.f32.mrb[0].mxu0
    %v218 = vadd.f32 %v115, %v217
    %v219 = vpop.f32.mrb[0].mxu0
    %v220 = vadd.f32 %v119, %v219
    %v221 = vpop.f32.mrb[0].mxu0
    %v222 = vadd.f32 %v115, %v221
    %v223 = vpop.f32.mrb[0].mxu0
    %v224 = vadd.f32 %v119, %v223
    %225 = vmatprep.mubr.bf16.mxu0 0
    %226 = vmatmul.mubr.bf16.gmra.mrb[0].mxu0 %v132
    %v227 = vpop.f32.mrb[0].mxu0
    %v228 = vadd.f32 %v115, %v227
    %v229 = vpop.f32.mrb[0].mxu0
    %v230 = vadd.f32 %v119, %v229
    %v231 = vpop.f32.mrb[0].mxu0
    %v232 = vadd.f32 %v115, %v231
    %v233 = vpop.f32.mrb[0].mxu0
    %v234 = vadd.f32 %v119, %v233
    %235 = vmatprep.mubr.bf16.mxu0 0
    %236 = vmatmul.mubr.bf16.gmra.mrb[0].mxu0 %v135
    %v237 = vpop.f32.mrb[0].mxu0
    %v238 = vadd.f32 %v115, %v237
    %v239 = vpop.f32.mrb[0].mxu0
    %v240 = vadd.f32 %v119, %v239
    %v241 = vpop.f32.mrb[0].mxu0
    %v242 = vadd.f32 %v115, %v241
    %v243 = vpop.f32.mrb[0].mxu0
    %v244 = vadd.f32 %v119, %v243
    %245 = vmatprep.mubr.bf16.mxu0 0
    %246 = vmatmul.mubr.bf16.gmra.mrb[0].mxu0 %v138
    %v247 = vpop.f32.mrb[0].mxu0
    %v248 = vadd.f32 %v115, %v247
    %v249 = vpop.f32.mrb[0].mxu0
    %v250 = vadd.f32 %v119, %v249
    %v251 = vpop.f32.mrb[0].mxu0
    %v252 = vadd.f32 %v115, %v251
    %v253 = vpop.f32.mrb[0].mxu0
    %v254 = vadd.f32 %v119, %v253
    %255 = vmatprep.mubr.bf16.mxu0 0
    %256 = vmatmul.mubr.bf16.gmra.mrb[0].mxu0 %v141
    %v257 = vpop.f32.mrb[0].mxu0
    %v258 = vadd.f32 %v115, %v257
    %v259 = vpop.f32.mrb[0].mxu0
    %v260 = vadd.f32 %v119, %v259
    %v261 = vpop.f32.mrb[0].mxu0
    %v262 = vadd.f32 %v115, %v261
    %v263 = vpop.f32.mrb[0].mxu0
    %v264 = vadd.f32 %v119, %v263
    %265 = vmatprep.mubr.bf16.mxu0 0
    %266 = vmatmul.mubr.bf16.gmra.mrb[0].mxu0 %v144
    %v267 = vpop.f32.mrb[0].mxu0
    %v268 = vadd.f32 %v115, %v267
    %v269 = vpop.f32.mrb[0].mxu0
    %v270 = vadd.f32 %v119, %v269
    %v271 = vpop.f32.mrb[0].mxu0
    %v272 = vadd.f32 %v115, %v271
    %v273 = vpop.f32.mrb[0].mxu0
    %v274 = vadd.f32 %v119, %v273
    %275 = vmatprep.mubr.bf16.mxu0 0
    %276 = vmatmul.mubr.bf16.gmra.mrb[0].mxu0 %v147
    %v277 = vpop.f32.mrb[0].mxu0
    %v278 = vadd.f32 %v115, %v277
    %v279 = vpop.f32.mrb[0].mxu0
    %v280 = vadd.f32 %v119, %v279
    %v281 = vpop.f32.mrb[0].mxu0
    %v282 = vadd.f32 %v115, %v281
    %v283 = vpop.f32.mrb[0].mxu0
    %v284 = vadd.f32 %v119, %v283
    %285 = vmatprep.mubr.bf16.mxu0 0
    %286 = vmatmul.mubr.bf16.gmra.mrb[0].mxu0 %v150
    %v287 = vpop.f32.mrb[0].mxu0
    %v288 = vadd.f32 %v115, %v287
    %v289 = vpop.f32.mrb[0].mxu0
    %v290 = vadd.f32 %v119, %v289
    %v291 = vpop.f32.mrb[0].mxu0
    %v292 = vadd.f32 %v115, %v291
    %v293 = vpop.f32.mrb[0].mxu0
    %v294 = vadd.f32 %v119, %v293
    %295 = vmatprep.mubr.bf16.mxu0 0
    %296 = vmatmul.mubr.bf16.gmra.mrb[0].mxu0 %v153
    %v297 = vpop.f32.mrb[0].mxu0
    %v298 = vadd.f32 %v115, %v297
    %v299 = vpop.f32.mrb[0].mxu0
    %v300 = vadd.f32 %v119, %v299
    %v301 = vpop.f32.mrb[0].mxu0
    %v302 = vadd.f32 %v115, %v301
    %v303 = vpop.f32.mrb[0].mxu0
    %v304 = vadd.f32 %v119, %v303
    %305 = vmatprep.mubr.bf16.mxu0 0
    %306 = vmatmul.mubr.bf16.gmra.mrb[0].mxu0 %v156
    %v307 = vpop.f32.mrb[0].mxu0
    %v308 = vadd.f32 %v115, %v307
    %v309 = vpop.f32.mrb[0].mxu0
    %v310 = vadd.f32 %v119, %v309
    %v311 = vpop.f32.mrb[0].mxu0
    %v312 = vadd.f32 %v115, %v311
    %v313 = vpop.f32.mrb[0].mxu0
    %v314 = vadd.f32 %v119, %v313
    %315 = vmatprep.mubr.bf16.mxu0 0
    %316 = vmatmul.mubr.bf16.gmra.mrb[0].mxu0 %v159
    %v317 = vpop.f32.mrb[0].mxu0
    %v318 = vadd.f32 %v115, %v317
    %v319 = vpop.f32.mrb[0].mxu0
    %v320 = vadd.f32 %v119, %v319
    %v321 = vpop.f32.mrb[0].mxu0
    %v322 = vadd.f32 %v115, %v321
    %v323 = vpop.f32.mrb[0].mxu0
    %v324 = vadd.f32 %v119, %v323
    %325 = vmatprep.mubr.bf16.mxu0 0
    %326 = vmatmul.mubr.bf16.gmra.mrb[0].mxu0 %v162
    %v327 = vpop.f32.mrb[0].mxu0
    %v328 = vadd.f32 %v115, %v327
    %v329 = vpop.f32.mrb[0].mxu0
    %v330 = vadd.f32 %v119, %v329
    %v331 = vpop.f32.mrb[0].mxu0
    %v332 = vadd.f32 %v115, %v331
    %v333 = vpop.f32.mrb[0].mxu0
    %v334 = vadd.f32 %v119, %v333
    %335 = vmatprep.mubr.bf16.mxu0 0
    %336 = vmatmul.mubr.bf16.gmra.mrb[0].mxu0 %v165
    %v337 = vpop.f32.mrb[0].mxu0
    %v338 = vadd.f32 %v115, %v337
    %v339 = vpop.f32.mrb[0].mxu0
    %v340 = vadd.f32 %v119, %v339
    %v341 = vpop.f32.mrb[0].mxu0
    %v342 = vadd.f32 %v115, %v341
    %v343 = vpop.f32.mrb[0].mxu0
    %v344 = vadd.f32 %v119, %v343
    %345 = vmatprep.mubr.bf16.mxu0 0
    %346 = vmatmul.mubr.bf16.gmra.mrb[0].mxu0 %v168
    %v347 = vpop.f32.mrb[0].mxu0
    %v348 = vadd.f32 %v115, %v347
    %v349 = vpop.f32.mrb[0].mxu0
    %v350 = vadd.f32 %v119, %v349
    %v351 = vpop.f32.mrb[0].mxu0
    %v352 = vadd.f32 %v115, %v351
    %v353 = vpop.f32.mrb[0].mxu0
    %v354 = vadd.f32 %v119, %v353
    %355 = vmatprep.mubr.bf16.mxu0 0
    %356 = vmatmul.mubr.bf16.gmra.mrb[0].mxu0 %v171
    %v357 = vpop.f32.mrb[0].mxu0
    %v358 = vadd.f32 %v115, %v357
    %v359 = vpop.f32.mrb[0].mxu0
    %v360 = vadd.f32 %v119, %v359
    %v361 = vpop.f32.mrb[0].mxu0
    %v362 = vadd.f32 %v115, %v361
    %v363 = vpop.f32.mrb[0].mxu0
    %v364 = vadd.f32 %v119, %v363
    %365 = vmatprep.mubr.bf16.mxu0 0
    %366 = vmatmul.mubr.bf16.gmra.mrb[0].mxu0 %v174
    %v367 = vpop.f32.mrb[0].mxu0
    %v368 = vadd.f32 %v115, %v367
    %v369 = vpop.f32.mrb[0].mxu0
    %v370 = vadd.f32 %v119, %v369
    %v371 = vpop.f32.mrb[0].mxu0
    %v372 = vadd.f32 %v115, %v371
    %v373 = vpop.f32.mrb[0].mxu0
    %v374 = vadd.f32 %v119, %v373
    %375 = vdwg.mxu0
    %v376 = vmax.f32 %v218, 0.0
    %v377 = vmax.f32 %v220, 0.0
    %v378 = vmax.f32 %v222, 0.0
    %v379 = vmax.f32 %v224, 0.0
    %v380 = vmax.f32 %v228, 0.0
    %v381 = vmax.f32 %v230, 0.0
    %v382 = vmax.f32 %v232, 0.0
    %v383 = vmax.f32 %v234, 0.0
    %v384 = vmax.f32 %v238, 0.0
    %v385 = vmax.f32 %v240, 0.0
    %v386 = vmax.f32 %v242, 0.0
    %v387 = vmax.f32 %v244, 0.0
    %v388 = vmax.f32 %v248, 0.0
    %v389 = vmax.f32 %v250, 0.0
    %v390 = vmax.f32 %v252, 0.0
    %v391 = vmax.f32 %v254, 0.0
    %v392 = vmax.f32 %v258, 0.0
    %v393 = vmax.f32 %v260, 0.0
    %v394 = vmax.f32 %v262, 0.0
    %v395 = vmax.f32 %v264, 0.0
    %v396 = vmax.f32 %v268, 0.0
    %v397 = vmax.f32 %v270, 0.0
    %v398 = vmax.f32 %v272, 0.0
    %v399 = vmax.f32 %v274, 0.0
    %v400 = vmax.f32 %v278, 0.0
    %v401 = vmax.f32 %v280, 0.0
    %v402 = vmax.f32 %v282, 0.0
    %v403 = vmax.f32 %v284, 0.0
    %v404 = vmax.f32 %v288, 0.0
    %v405 = vmax.f32 %v290, 0.0
    %v406 = vmax.f32 %v292, 0.0
    %v407 = vmax.f32 %v294, 0.0
    %v408 = vmax.f32 %v298, 0.0
    %v409 = vmax.f32 %v300, 0.0
    %v410 = vmax.f32 %v302, 0.0
    %v411 = vmax.f32 %v304, 0.0
    %v412 = vmax.f32 %v308, 0.0
    %v413 = vmax.f32 %v310, 0.0
    %v414 = vmax.f32 %v312, 0.0
    %v415 = vmax.f32 %v314, 0.0
    %v416 = vmax.f32 %v318, 0.0
    %v417 = vmax.f32 %v320, 0.0
    %v418 = vmax.f32 %v322, 0.0
    %v419 = vmax.f32 %v324, 0.0
    %v420 = vmax.f32 %v328, 0.0
    %v421 = vmax.f32 %v330, 0.0
    %v422 = vmax.f32 %v332, 0.0
    %v423 = vmax.f32 %v334, 0.0
    %v424 = vmax.f32 %v338, 0.0
    %v425 = vmax.f32 %v340, 0.0
    %v426 = vmax.f32 %v342, 0.0
    %v427 = vmax.f32 %v344, 0.0
    %v428 = vmax.f32 %v348, 0.0
    %v429 = vmax.f32 %v350, 0.0
    %v430 = vmax.f32 %v352, 0.0
    %v431 = vmax.f32 %v354, 0.0
    %v432 = vmax.f32 %v358, 0.0
    %v433 = vmax.f32 %v360, 0.0
    %v434 = vmax.f32 %v362, 0.0
    %v435 = vmax.f32 %v364, 0.0
    %v436 = vmax.f32 %v368, 0.0
    %v437 = vmax.f32 %v370, 0.0
    %v438 = vmax.f32 %v372, 0.0
    %v439 = vmax.f32 %v374, 0.0
    %v440 = vpack.c.bf16 %v378, %v376
    %v441 = vpack.c.bf16 %v379, %v377
    %v442 = vpack.c.bf16 %v382, %v380
    %v443 = vpack.c.bf16 %v383, %v381
    %v444 = vpack.c.bf16 %v386, %v384
    %v445 = vpack.c.bf16 %v387, %v385
    %v446 = vpack.c.bf16 %v390, %v388
    %v447 = vpack.c.bf16 %v391, %v389
    %v448 = vpack.c.bf16 %v394, %v392
    %v449 = vpack.c.bf16 %v395, %v393
    %v450 = vpack.c.bf16 %v398, %v396
    %v451 = vpack.c.bf16 %v399, %v397
    %v452 = vpack.c.bf16 %v402, %v400
    %v453 = vpack.c.bf16 %v403, %v401
    %v454 = vpack.c.bf16 %v406, %v404
    %v455 = vpack.c.bf16 %v407, %v405
    %v456 = vpack.c.bf16 %v410, %v408
    %v457 = vpack.c.bf16 %v411, %v409
    %v458 = vpack.c.bf16 %v414, %v412
    %v459 = vpack.c.bf16 %v415, %v413
    %v460 = vpack.c.bf16 %v418, %v416
    %v461 = vpack.c.bf16 %v419, %v417
    %v462 = vpack.c.bf16 %v422, %v420
    %v463 = vpack.c.bf16 %v423, %v421
    %v464 = vpack.c.bf16 %v426, %v424
    %v465 = vpack.c.bf16 %v427, %v425
    %v466 = vpack.c.bf16 %v430, %v428
    %v467 = vpack.c.bf16 %v431, %v429
    %v468 = vpack.c.bf16 %v434, %v432
    %v469 = vpack.c.bf16 %v435, %v433
    %v470 = vpack.c.bf16 %v438, %v436
    %v471 = vpack.c.bf16 %v439, %v437
    %v472 = vld [vmem:[#allocation2] sm:$0xff]
    %v473 = vld [vmem:[#allocation2 + $0x8] sm:$0xff]
    %v474 = vld [vmem:[#allocation2 + $0x10] sm:$0xff]
    %v475 = vld [vmem:[#allocation2 + $0x18] sm:$0xff]
    %v476 = vld [vmem:[#allocation2 + $0x20] sm:$0xff]
    %v477 = vld [vmem:[#allocation2 + $0x28] sm:$0xff]
    %v478 = vld [vmem:[#allocation2 + $0x30] sm:$0xff]
    %v479 = vld [vmem:[#allocation2 + $0x38] sm:$0xff]
    %v480 = vld [vmem:[#allocation2 + $0x40] sm:$0xff]
    %v481 = vld [vmem:[#allocation2 + $0x48] sm:$0xff]
    %v482 = vld [vmem:[#allocation2 + $0x50] sm:$0xff]
    %v483 = vld [vmem:[#allocation2 + $0x58] sm:$0xff]
    %v484 = vld [vmem:[#allocation2 + $0x60] sm:$0xff]
    %v485 = vld [vmem:[#allocation2 + $0x68] sm:$0xff]
    %v486 = vld [vmem:[#allocation2 + $0x70] sm:$0xff]
    %v487 = vld [vmem:[#allocation2 + $0x78] sm:$0xff]
    %v488 = vld [vmem:[#allocation2 + $0x80] sm:$0xff]
    %v489 = vld [vmem:[#allocation2 + $0x88] sm:$0xff]
    %v490 = vld [vmem:[#allocation2 + $0x90] sm:$0xff]
    %v491 = vld [vmem:[#allocation2 + $0x98] sm:$0xff]
    %v492 = vld [vmem:[#allocation2 + $0xa0] sm:$0xff]
    %v493 = vld [vmem:[#allocation2 + $0xa8] sm:$0xff]
    %v494 = vld [vmem:[#allocation2 + $0xb0] sm:$0xff]
    %v495 = vld [vmem:[#allocation2 + $0xb8] sm:$0xff]
    %v496 = vld [vmem:[#allocation2 + $0xc0] sm:$0xff]
    %v497 = vld [vmem:[#allocation2 + $0xc8] sm:$0xff]
    %v498 = vld [vmem:[#allocation2 + $0xd0] sm:$0xff]
    %v499 = vld [vmem:[#allocation2 + $0xd8] sm:$0xff]
    %v500 = vld [vmem:[#allocation2 + $0xe0] sm:$0xff]
    %v501 = vld [vmem:[#allocation2 + $0xe8] sm:$0xff]
    %v502 = vld [vmem:[#allocation2 + $0xf0] sm:$0xff]
    %v503 = vld [vmem:[#allocation2 + $0xf8] sm:$0xff]
    %v504 = vld [vmem:[#allocation2 + $0x100] sm:$0xff]
    %v505 = vld [vmem:[#allocation2 + $0x108] sm:$0xff]
    %v506 = vld [vmem:[#allocation2 + $0x110] sm:$0xff]
    %v507 = vld [vmem:[#allocation2 + $0x118] sm:$0xff]
    %v508 = vld [vmem:[#allocation2 + $0x120] sm:$0xff]
    %v509 = vld [vmem:[#allocation2 + $0x128] sm:$0xff]
    %v510 = vld [vmem:[#allocation2 + $0x130] sm:$0xff]
    %v511 = vld [vmem:[#allocation2 + $0x138] sm:$0xff]
    %v512 = vld [vmem:[#allocation2 + $0x140] sm:$0xff]
    %v513 = vld [vmem:[#allocation2 + $0x148] sm:$0xff]
    %v514 = vld [vmem:[#allocation2 + $0x150] sm:$0xff]
    %v515 = vld [vmem:[#allocation2 + $0x158] sm:$0xff]
    %v516 = vld [vmem:[#allocation2 + $0x160] sm:$0xff]
    %v517 = vld [vmem:[#allocation2 + $0x168] sm:$0xff]
    %v518 = vld [vmem:[#allocation2 + $0x170] sm:$0xff]
    %v519 = vld [vmem:[#allocation2 + $0x178] sm:$0xff]
    %v520 = vld [vmem:[#allocation2 + $0x180] sm:$0xff]
    %v521 = vld [vmem:[#allocation2 + $0x188] sm:$0xff]
    %v522 = vld [vmem:[#allocation2 + $0x190] sm:$0xff]
    %v523 = vld [vmem:[#allocation2 + $0x198] sm:$0xff]
    %v524 = vld [vmem:[#allocation2 + $0x1a0] sm:$0xff]
    %v525 = vld [vmem:[#allocation2 + $0x1a8] sm:$0xff]
    %v526 = vld [vmem:[#allocation2 + $0x1b0] sm:$0xff]
    %v527 = vld [vmem:[#allocation2 + $0x1b8] sm:$0xff]
    %v528 = vld [vmem:[#allocation2 + $0x1c0] sm:$0xff]
    %v529 = vld [vmem:[#allocation2 + $0x1c8] sm:$0xff]
    %v530 = vld [vmem:[#allocation2 + $0x1d0] sm:$0xff]
    %v531 = vld [vmem:[#allocation2 + $0x1d8] sm:$0xff]
    %v532 = vld [vmem:[#allocation2 + $0x1e0] sm:$0xff]
    %v533 = vld [vmem:[#allocation2 + $0x1e8] sm:$0xff]
    %v534 = vld [vmem:[#allocation2 + $0x1f0] sm:$0xff]
    %v535 = vld [vmem:[#allocation2 + $0x1f8] sm:$0xff]
    %v536 = vld [vmem:[%s4] sm:$0xf]
    %v538 = vlaneseq
    %v539 = vshrl.u32 %v538, 7
    %v540 = vsub.s32 0, %v539
    %v541 = vrot.slane %v536, %v540
    %v542 = vlaneseq
    %v543 = vshrl.u32 %v542, 7
    %v544 = vsub.s32 1, %v543
    %v545 = vrot.slane %v536, %v544
    %v546 = vlaneseq
    %v547 = vshrl.u32 %v546, 7
    %v548 = vsub.s32 2, %v547
    %v549 = vrot.slane %v536, %v548
    %v550 = vlaneseq
    %v551 = vshrl.u32 %v550, 7
    %v552 = vsub.s32 3, %v551
    %v553 = vrot.slane %v536, %v552
    %v622 = vunpack.c.l.b16 %v472
    %v623 = vunpack.c.h.b16 %v472
    %v624 = vunpack.c.l.b16 %v473
    %v625 = vunpack.c.h.b16 %v473
    %v626 = vunpack.c.l.b16 %v474
    %v627 = vunpack.c.h.b16 %v474
    %v628 = vunpack.c.l.b16 %v475
    %v629 = vunpack.c.h.b16 %v475
    %v630 = vunpack.c.l.b16 %v476
    %v631 = vunpack.c.h.b16 %v476
    %v632 = vunpack.c.l.b16 %v477
    %v633 = vunpack.c.h.b16 %v477
    %v634 = vunpack.c.l.b16 %v478
    %v635 = vunpack.c.h.b16 %v478
    %v636 = vunpack.c.l.b16 %v479
    %v637 = vunpack.c.h.b16 %v479
    %v638 = vunpack.c.l.b16 %v480
    %v639 = vunpack.c.h.b16 %v480
    %v640 = vunpack.c.l.b16 %v481
    %v641 = vunpack.c.h.b16 %v481
    %v642 = vunpack.c.l.b16 %v482
    %v643 = vunpack.c.h.b16 %v482
    %v644 = vunpack.c.l.b16 %v483
    %v645 = vunpack.c.h.b16 %v483
    %v646 = vunpack.c.l.b16 %v484
    %v647 = vunpack.c.h.b16 %v484
    %v648 = vunpack.c.l.b16 %v485
    %v649 = vunpack.c.h.b16 %v485
    %v650 = vunpack.c.l.b16 %v486
    %v651 = vunpack.c.h.b16 %v486
    %v652 = vunpack.c.l.b16 %v487
    %v653 = vunpack.c.h.b16 %v487
    %v654 = vunpack.c.l.b16 %v488
    %v655 = vunpack.c.h.b16 %v488
    %v656 = vunpack.c.l.b16 %v489
    %v657 = vunpack.c.h.b16 %v489
    %v658 = vunpack.c.l.b16 %v490
    %v659 = vunpack.c.h.b16 %v490
    %v660 = vunpack.c.l.b16 %v491
    %v661 = vunpack.c.h.b16 %v491
    %v662 = vunpack.c.l.b16 %v492
    %v663 = vunpack.c.h.b16 %v492
    %v664 = vunpack.c.l.b16 %v493
    %v665 = vunpack.c.h.b16 %v493
    %v666 = vunpack.c.l.b16 %v494
    %v667 = vunpack.c.h.b16 %v494
    %v668 = vunpack.c.l.b16 %v495
    %v669 = vunpack.c.h.b16 %v495
    %v670 = vunpack.c.l.b16 %v496
    %v671 = vunpack.c.h.b16 %v496
    %v672 = vunpack.c.l.b16 %v497
    %v673 = vunpack.c.h.b16 %v497
    %v674 = vunpack.c.l.b16 %v498
    %v675 = vunpack.c.h.b16 %v498
    %v676 = vunpack.c.l.b16 %v499
    %v677 = vunpack.c.h.b16 %v499
    %v678 = vunpack.c.l.b16 %v500
    %v679 = vunpack.c.h.b16 %v500
    %v680 = vunpack.c.l.b16 %v501
    %v681 = vunpack.c.h.b16 %v501
    %v682 = vunpack.c.l.b16 %v502
    %v683 = vunpack.c.h.b16 %v502
    %v684 = vunpack.c.l.b16 %v503
    %v685 = vunpack.c.h.b16 %v503
    %v686 = vunpack.c.l.b16 %v504
    %v687 = vunpack.c.h.b16 %v504
    %v688 = vunpack.c.l.b16 %v505
    %v689 = vunpack.c.h.b16 %v505
    %v690 = vunpack.c.l.b16 %v506
    %v691 = vunpack.c.h.b16 %v506
    %v692 = vunpack.c.l.b16 %v507
    %v693 = vunpack.c.h.b16 %v507
    %v694 = vunpack.c.l.b16 %v508
    %v695 = vunpack.c.h.b16 %v508
    %v696 = vunpack.c.l.b16 %v509
    %v697 = vunpack.c.h.b16 %v509
    %v698 = vunpack.c.l.b16 %v510
    %v699 = vunpack.c.h.b16 %v510
    %v700 = vunpack.c.l.b16 %v511
    %v701 = vunpack.c.h.b16 %v511
    %v702 = vunpack.c.l.b16 %v512
    %v703 = vunpack.c.h.b16 %v512
    %v704 = vunpack.c.l.b16 %v513
    %v705 = vunpack.c.h.b16 %v513
    %v706 = vunpack.c.l.b16 %v514
    %v707 = vunpack.c.h.b16 %v514
    %v708 = vunpack.c.l.b16 %v515
    %v709 = vunpack.c.h.b16 %v515
    %v710 = vunpack.c.l.b16 %v516
    %v711 = vunpack.c.h.b16 %v516
    %v712 = vunpack.c.l.b16 %v517
    %v713 = vunpack.c.h.b16 %v517
    %v714 = vunpack.c.l.b16 %v518
    %v715 = vunpack.c.h.b16 %v518
    %v716 = vunpack.c.l.b16 %v519
    %v717 = vunpack.c.h.b16 %v519
    %v718 = vunpack.c.l.b16 %v520
    %v719 = vunpack.c.h.b16 %v520
    %v720 = vunpack.c.l.b16 %v521
    %v721 = vunpack.c.h.b16 %v521
    %v722 = vunpack.c.l.b16 %v522
    %v723 = vunpack.c.h.b16 %v522
    %v724 = vunpack.c.l.b16 %v523
    %v725 = vunpack.c.h.b16 %v523
    %v726 = vunpack.c.l.b16 %v524
    %v727 = vunpack.c.h.b16 %v524
    %v728 = vunpack.c.l.b16 %v525
    %v729 = vunpack.c.h.b16 %v525
    %v730 = vunpack.c.l.b16 %v526
    %v731 = vunpack.c.h.b16 %v526
    %v732 = vunpack.c.l.b16 %v527
    %v733 = vunpack.c.h.b16 %v527
    %v734 = vunpack.c.l.b16 %v528
    %v735 = vunpack.c.h.b16 %v528
    %v736 = vunpack.c.l.b16 %v529
    %v737 = vunpack.c.h.b16 %v529
    %v738 = vunpack.c.l.b16 %v530
    %v739 = vunpack.c.h.b16 %v530
    %v740 = vunpack.c.l.b16 %v531
    %v741 = vunpack.c.h.b16 %v531
    %v742 = vunpack.c.l.b16 %v532
    %v743 = vunpack.c.h.b16 %v532
    %v744 = vunpack.c.l.b16 %v533
    %v745 = vunpack.c.h.b16 %v533
    %v746 = vunpack.c.l.b16 %v534
    %v747 = vunpack.c.h.b16 %v534
    %v748 = vunpack.c.l.b16 %v535
    %v749 = vunpack.c.h.b16 %v535
    %v750 = vpack.c.b16 %v626, %v622
    %v751 = vpack.c.b16 %v627, %v623
    %v752 = vpack.c.b16 %v628, %v624
    %v753 = vpack.c.b16 %v629, %v625
    %v754 = vpack.c.b16 %v634, %v630
    %v755 = vpack.c.b16 %v635, %v631
    %v756 = vpack.c.b16 %v636, %v632
    %v757 = vpack.c.b16 %v637, %v633
    %v758 = vpack.c.b16 %v642, %v638
    %v759 = vpack.c.b16 %v643, %v639
    %v760 = vpack.c.b16 %v644, %v640
    %v761 = vpack.c.b16 %v645, %v641
    %v762 = vpack.c.b16 %v650, %v646
    %v763 = vpack.c.b16 %v651, %v647
    %v764 = vpack.c.b16 %v652, %v648
    %v765 = vpack.c.b16 %v653, %v649
    %v766 = vpack.c.b16 %v658, %v654
    %v767 = vpack.c.b16 %v659, %v655
    %v768 = vpack.c.b16 %v660, %v656
    %v769 = vpack.c.b16 %v661, %v657
    %v770 = vpack.c.b16 %v666, %v662
    %v771 = vpack.c.b16 %v667, %v663
    %v772 = vpack.c.b16 %v668, %v664
    %v773 = vpack.c.b16 %v669, %v665
    %v774 = vpack.c.b16 %v674, %v670
    %v775 = vpack.c.b16 %v675, %v671
    %v776 = vpack.c.b16 %v676, %v672
    %v777 = vpack.c.b16 %v677, %v673
    %v778 = vpack.c.b16 %v682, %v678
    %v779 = vpack.c.b16 %v683, %v679
    %v780 = vpack.c.b16 %v684, %v680
    %v781 = vpack.c.b16 %v685, %v681
    %v782 = vpack.c.b16 %v690, %v686
    %v783 = vpack.c.b16 %v691, %v687
    %v784 = vpack.c.b16 %v692, %v688
    %v785 = vpack.c.b16 %v693, %v689
    %v786 = vpack.c.b16 %v698, %v694
    %v787 = vpack.c.b16 %v699, %v695
    %v788 = vpack.c.b16 %v700, %v696
    %v789 = vpack.c.b16 %v701, %v697
    %v790 = vpack.c.b16 %v706, %v702
    %v791 = vpack.c.b16 %v707, %v703
    %v792 = vpack.c.b16 %v708, %v704
    %v793 = vpack.c.b16 %v709, %v705
    %v794 = vpack.c.b16 %v714, %v710
    %v795 = vpack.c.b16 %v715, %v711
    %v796 = vpack.c.b16 %v716, %v712
    %v797 = vpack.c.b16 %v717, %v713
    %v798 = vpack.c.b16 %v722, %v718
    %v799 = vpack.c.b16 %v723, %v719
    %v800 = vpack.c.b16 %v724, %v720
    %v801 = vpack.c.b16 %v725, %v721
    %v802 = vpack.c.b16 %v730, %v726
    %v803 = vpack.c.b16 %v731, %v727
    %v804 = vpack.c.b16 %v732, %v728
    %v805 = vpack.c.b16 %v733, %v729
    %v806 = vpack.c.b16 %v738, %v734
    %v807 = vpack.c.b16 %v739, %v735
    %v808 = vpack.c.b16 %v740, %v736
    %v809 = vpack.c.b16 %v741, %v737
    %v810 = vpack.c.b16 %v746, %v742
    %v811 = vpack.c.b16 %v747, %v743
    %v812 = vpack.c.b16 %v748, %v744
    %v813 = vpack.c.b16 %v749, %v745
    %878 = vmatprep.subr.bf16.mxu0 %v751
    %879 = vmatpush1.bf16.msra.mxu0 %v750
    %880 = vmatprep.subr.bf16.mxu0 %v755
    %881 = vmatpush1.bf16.msra.mxu0 %v754
    %882 = vmatprep.subr.bf16.mxu0 %v759
    %883 = vmatpush1.bf16.msra.mxu0 %v758
    %884 = vmatprep.subr.bf16.mxu0 %v763
    %885 = vmatpush1.bf16.msra.mxu0 %v762
    %886 = vmatprep.subr.bf16.mxu0 %v767
    %887 = vmatpush1.bf16.msra.mxu0 %v766
    %888 = vmatprep.subr.bf16.mxu0 %v771
    %889 = vmatpush1.bf16.msra.mxu0 %v770
    %890 = vmatprep.subr.bf16.mxu0 %v775
    %891 = vmatpush1.bf16.msra.mxu0 %v774
    %892 = vmatprep.subr.bf16.mxu0 %v779
    %893 = vmatpush1.bf16.msra.mxu0 %v778
    %894 = vmatprep.subr.bf16.mxu0 %v783
    %895 = vmatpush1.bf16.msra.mxu0 %v782
    %896 = vmatprep.subr.bf16.mxu0 %v787
    %897 = vmatpush1.bf16.msra.mxu0 %v786
    %898 = vmatprep.subr.bf16.mxu0 %v791
    %899 = vmatpush1.bf16.msra.mxu0 %v790
    %900 = vmatprep.subr.bf16.mxu0 %v795
    %901 = vmatpush1.bf16.msra.mxu0 %v794
    %902 = vmatprep.subr.bf16.mxu0 %v799
    %903 = vmatpush1.bf16.msra.mxu0 %v798
    %904 = vmatprep.subr.bf16.mxu0 %v803
    %905 = vmatpush1.bf16.msra.mxu0 %v802
    %906 = vmatprep.subr.bf16.mxu0 %v807
    %907 = vmatpush1.bf16.msra.mxu0 %v806
    %908 = vmatprep.subr.bf16.mxu0 %v811
    %909 = vmatpush1.bf16.msra.mxu0 %v810
    %910 = vmatprep.mubr.bf16.mxu0 %v441
    %911 = vmatmul.mubr.bf16.gmra.mrb[0].mxu0 %v440
    %v912 = vpop.f32.mrb[0].mxu0
    %v913 = vadd.f32 %v541, %v912
    %v914 = vpop.f32.mrb[0].mxu0
    %v915 = vadd.f32 %v545, %v914
    %v916 = vpop.f32.mrb[0].mxu0
    %v917 = vadd.f32 %v541, %v916
    %v918 = vpop.f32.mrb[0].mxu0
    %v919 = vadd.f32 %v545, %v918
    %920 = vmatprep.mubr.bf16.mxu0 %v443
    %921 = vmatmul.mubr.bf16.gmra.mrb[0].mxu0 %v442
    %v922 = vpop.f32.mrb[0].mxu0
    %v923 = vadd.f32 %v541, %v922
    %v924 = vpop.f32.mrb[0].mxu0
    %v925 = vadd.f32 %v545, %v924
    %v926 = vpop.f32.mrb[0].mxu0
    %v927 = vadd.f32 %v541, %v926
    %v928 = vpop.f32.mrb[0].mxu0
    %v929 = vadd.f32 %v545, %v928
    %930 = vmatprep.mubr.bf16.mxu0 %v445
    %931 = vmatmul.mubr.bf16.gmra.mrb[0].mxu0 %v444
    %v932 = vpop.f32.mrb[0].mxu0
    %v933 = vadd.f32 %v541, %v932
    %v934 = vpop.f32.mrb[0].mxu0
    %v935 = vadd.f32 %v545, %v934
    %v936 = vpop.f32.mrb[0].mxu0
    %v937 = vadd.f32 %v541, %v936
    %v938 = vpop.f32.mrb[0].mxu0
    %v939 = vadd.f32 %v545, %v938
    %940 = vmatprep.mubr.bf16.mxu0 %v447
    %941 = vmatmul.mubr.bf16.gmra.mrb[0].mxu0 %v446
    %v942 = vpop.f32.mrb[0].mxu0
    %v943 = vadd.f32 %v541, %v942
    %v944 = vpop.f32.mrb[0].mxu0
    %v945 = vadd.f32 %v545, %v944
    %v946 = vpop.f32.mrb[0].mxu0
    %v947 = vadd.f32 %v541, %v946
    %v948 = vpop.f32.mrb[0].mxu0
    %v949 = vadd.f32 %v545, %v948
    %950 = vmatprep.mubr.bf16.mxu0 %v449
    %951 = vmatmul.mubr.bf16.gmra.mrb[0].mxu0 %v448
    %v952 = vpop.f32.mrb[0].mxu0
    %v953 = vadd.f32 %v541, %v952
    %v954 = vpop.f32.mrb[0].mxu0
    %v955 = vadd.f32 %v545, %v954
    %v956 = vpop.f32.mrb[0].mxu0
    %v957 = vadd.f32 %v541, %v956
    %v958 = vpop.f32.mrb[0].mxu0
    %v959 = vadd.f32 %v545, %v958
    %960 = vmatprep.mubr.bf16.mxu0 %v451
    %961 = vmatmul.mubr.bf16.gmra.mrb[0].mxu0 %v450
    %v962 = vpop.f32.mrb[0].mxu0
    %v963 = vadd.f32 %v541, %v962
    %v964 = vpop.f32.mrb[0].mxu0
    %v965 = vadd.f32 %v545, %v964
    %v966 = vpop.f32.mrb[0].mxu0
    %v967 = vadd.f32 %v541, %v966
    %v968 = vpop.f32.mrb[0].mxu0
    %v969 = vadd.f32 %v545, %v968
    %970 = vmatprep.mubr.bf16.mxu0 %v453
    %971 = vmatmul.mubr.bf16.gmra.mrb[0].mxu0 %v452
    %v972 = vpop.f32.mrb[0].mxu0
    %v973 = vadd.f32 %v541, %v972
    %v974 = vpop.f32.mrb[0].mxu0
    %v975 = vadd.f32 %v545, %v974
    %v976 = vpop.f32.mrb[0].mxu0
    %v977 = vadd.f32 %v541, %v976
    %v978 = vpop.f32.mrb[0].mxu0
    %v979 = vadd.f32 %v545, %v978
    %980 = vmatprep.mubr.bf16.mxu0 %v455
    %981 = vmatmul.mubr.bf16.gmra.mrb[0].mxu0 %v454
    %v982 = vpop.f32.mrb[0].mxu0
    %v983 = vadd.f32 %v541, %v982
    %v984 = vpop.f32.mrb[0].mxu0
    %v985 = vadd.f32 %v545, %v984
    %v986 = vpop.f32.mrb[0].mxu0
    %v987 = vadd.f32 %v541, %v986
    %v988 = vpop.f32.mrb[0].mxu0
    %v989 = vadd.f32 %v545, %v988
    %990 = vmatprep.mubr.bf16.mxu0 %v457
    %991 = vmatmul.mubr.bf16.gmra.mrb[0].mxu0 %v456
    %v992 = vpop.f32.mrb[0].mxu0
    %v993 = vadd.f32 %v541, %v992
    %v994 = vpop.f32.mrb[0].mxu0
    %v995 = vadd.f32 %v545, %v994
    %v996 = vpop.f32.mrb[0].mxu0
    %v997 = vadd.f32 %v541, %v996
    %v998 = vpop.f32.mrb[0].mxu0
    %v999 = vadd.f32 %v545, %v998
    %1000 = vmatprep.mubr.bf16.mxu0 %v459
    %1001 = vmatmul.mubr.bf16.gmra.mrb[0].mxu0 %v458
    %v1002 = vpop.f32.mrb[0].mxu0
    %v1003 = vadd.f32 %v541, %v1002
    %v1004 = vpop.f32.mrb[0].mxu0
    %v1005 = vadd.f32 %v545, %v1004
    %v1006 = vpop.f32.mrb[0].mxu0
    %v1007 = vadd.f32 %v541, %v1006
    %v1008 = vpop.f32.mrb[0].mxu0
    %v1009 = vadd.f32 %v545, %v1008
    %1010 = vmatprep.mubr.bf16.mxu0 %v461
    %1011 = vmatmul.mubr.bf16.gmra.mrb[0].mxu0 %v460
    %v1012 = vpop.f32.mrb[0].mxu0
    %v1013 = vadd.f32 %v541, %v1012
    %v1014 = vpop.f32.mrb[0].mxu0
    %v1015 = vadd.f32 %v545, %v1014
    %v1016 = vpop.f32.mrb[0].mxu0
    %v1017 = vadd.f32 %v541, %v1016
    %v1018 = vpop.f32.mrb[0].mxu0
    %v1019 = vadd.f32 %v545, %v1018
    %1020 = vmatprep.mubr.bf16.mxu0 %v463
    %1021 = vmatmul.mubr.bf16.gmra.mrb[0].mxu0 %v462
    %v1022 = vpop.f32.mrb[0].mxu0
    %v1023 = vadd.f32 %v541, %v1022
    %v1024 = vpop.f32.mrb[0].mxu0
    %v1025 = vadd.f32 %v545, %v1024
    %v1026 = vpop.f32.mrb[0].mxu0
    %v1027 = vadd.f32 %v541, %v1026
    %v1028 = vpop.f32.mrb[0].mxu0
    %v1029 = vadd.f32 %v545, %v1028
    %1030 = vmatprep.mubr.bf16.mxu0 %v465
    %1031 = vmatmul.mubr.bf16.gmra.mrb[0].mxu0 %v464
    %v1032 = vpop.f32.mrb[0].mxu0
    %v1033 = vadd.f32 %v541, %v1032
    %v1034 = vpop.f32.mrb[0].mxu0
    %v1035 = vadd.f32 %v545, %v1034
    %v1036 = vpop.f32.mrb[0].mxu0
    %v1037 = vadd.f32 %v541, %v1036
    %v1038 = vpop.f32.mrb[0].mxu0
    %v1039 = vadd.f32 %v545, %v1038
    %1040 = vmatprep.mubr.bf16.mxu0 %v467
    %1041 = vmatmul.mubr.bf16.gmra.mrb[0].mxu0 %v466
    %v1042 = vpop.f32.mrb[0].mxu0
    %v1043 = vadd.f32 %v541, %v1042
    %v1044 = vpop.f32.mrb[0].mxu0
    %v1045 = vadd.f32 %v545, %v1044
    %v1046 = vpop.f32.mrb[0].mxu0
    %v1047 = vadd.f32 %v541, %v1046
    %v1048 = vpop.f32.mrb[0].mxu0
    %v1049 = vadd.f32 %v545, %v1048
    %1050 = vmatprep.mubr.bf16.mxu0 %v469
    %1051 = vmatmul.mubr.bf16.gmra.mrb[0].mxu0 %v468
    %v1052 = vpop.f32.mrb[0].mxu0
    %v1053 = vadd.f32 %v541, %v1052
    %v1054 = vpop.f32.mrb[0].mxu0
    %v1055 = vadd.f32 %v545, %v1054
    %v1056 = vpop.f32.mrb[0].mxu0
    %v1057 = vadd.f32 %v541, %v1056
    %v1058 = vpop.f32.mrb[0].mxu0
    %v1059 = vadd.f32 %v545, %v1058
    %1060 = vmatprep.mubr.bf16.mxu0 %v471
    %1061 = vmatmul.mubr.bf16.gmra.mrb[0].mxu0 %v470
    %v1062 = vpop.f32.mrb[0].mxu0
    %v1063 = vadd.f32 %v541, %v1062
    %v1064 = vpop.f32.mrb[0].mxu0
    %v1065 = vadd.f32 %v545, %v1064
    %v1066 = vpop.f32.mrb[0].mxu0
    %v1067 = vadd.f32 %v541, %v1066
    %v1068 = vpop.f32.mrb[0].mxu0
    %v1069 = vadd.f32 %v545, %v1068
    %1070 = vdwg.mxu0
    %1071 = vmatprep.subr.bf16.mxu0 %v753
    %1072 = vmatpush1.bf16.msra.mxu0 %v752
    %1073 = vmatprep.subr.bf16.mxu0 %v757
    %1074 = vmatpush1.bf16.msra.mxu0 %v756
    %1075 = vmatprep.subr.bf16.mxu0 %v761
    %1076 = vmatpush1.bf16.msra.mxu0 %v760
    %1077 = vmatprep.subr.bf16.mxu0 %v765
    %1078 = vmatpush1.bf16.msra.mxu0 %v764
    %1079 = vmatprep.subr.bf16.mxu0 %v769
    %1080 = vmatpush1.bf16.msra.mxu0 %v768
    %1081 = vmatprep.subr.bf16.mxu0 %v773
    %1082 = vmatpush1.bf16.msra.mxu0 %v772
    %1083 = vmatprep.subr.bf16.mxu0 %v777
    %1084 = vmatpush1.bf16.msra.mxu0 %v776
    %1085 = vmatprep.subr.bf16.mxu0 %v781
    %1086 = vmatpush1.bf16.msra.mxu0 %v780
    %1087 = vmatprep.subr.bf16.mxu0 %v785
    %1088 = vmatpush1.bf16.msra.mxu0 %v784
    %1089 = vmatprep.subr.bf16.mxu0 %v789
    %1090 = vmatpush1.bf16.msra.mxu0 %v788
    %1091 = vmatprep.subr.bf16.mxu0 %v793
    %1092 = vmatpush1.bf16.msra.mxu0 %v792
    %1093 = vmatprep.subr.bf16.mxu0 %v797
    %1094 = vmatpush1.bf16.msra.mxu0 %v796
    %1095 = vmatprep.subr.bf16.mxu0 %v801
    %1096 = vmatpush1.bf16.msra.mxu0 %v800
    %1097 = vmatprep.subr.bf16.mxu0 %v805
    %1098 = vmatpush1.bf16.msra.mxu0 %v804
    %1099 = vmatprep.subr.bf16.mxu0 %v809
    %1100 = vmatpush1.bf16.msra.mxu0 %v808
    %1101 = vmatprep.subr.bf16.mxu0 %v813
    %1102 = vmatpush1.bf16.msra.mxu0 %v812
    %1103 = vmatprep.mubr.bf16.mxu0 %v441
    %1104 = vmatmul.mubr.bf16.gmra.mrb[0].mxu0 %v440
    %v1105 = vpop.f32.mrb[0].mxu0
    %v1106 = vadd.f32 %v549, %v1105
    %v1107 = vpop.f32.mrb[0].mxu0
    %v1108 = vadd.f32 %v553, %v1107
    %v1109 = vpop.f32.mrb[0].mxu0
    %v1110 = vadd.f32 %v549, %v1109
    %v1111 = vpop.f32.mrb[0].mxu0
    %v1112 = vadd.f32 %v553, %v1111
    %1113 = vmatprep.mubr.bf16.mxu0 %v443
    %1114 = vmatmul.mubr.bf16.gmra.mrb[0].mxu0 %v442
    %v1115 = vpop.f32.mrb[0].mxu0
    %v1116 = vadd.f32 %v549, %v1115
    %v1117 = vpop.f32.mrb[0].mxu0
    %v1118 = vadd.f32 %v553, %v1117
    %v1119 = vpop.f32.mrb[0].mxu0
    %v1120 = vadd.f32 %v549, %v1119
    %v1121 = vpop.f32.mrb[0].mxu0
    %v1122 = vadd.f32 %v553, %v1121
    %1123 = vmatprep.mubr.bf16.mxu0 %v445
    %1124 = vmatmul.mubr.bf16.gmra.mrb[0].mxu0 %v444
    %v1125 = vpop.f32.mrb[0].mxu0
    %v1126 = vadd.f32 %v549, %v1125
    %v1127 = vpop.f32.mrb[0].mxu0
    %v1128 = vadd.f32 %v553, %v1127
    %v1129 = vpop.f32.mrb[0].mxu0
    %v1130 = vadd.f32 %v549, %v1129
    %v1131 = vpop.f32.mrb[0].mxu0
    %v1132 = vadd.f32 %v553, %v1131
    %1133 = vmatprep.mubr.bf16.mxu0 %v447
    %1134 = vmatmul.mubr.bf16.gmra.mrb[0].mxu0 %v446
    %v1135 = vpop.f32.mrb[0].mxu0
    %v1136 = vadd.f32 %v549, %v1135
    %v1137 = vpop.f32.mrb[0].mxu0
    %v1138 = vadd.f32 %v553, %v1137
    %v1139 = vpop.f32.mrb[0].mxu0
    %v1140 = vadd.f32 %v549, %v1139
    %v1141 = vpop.f32.mrb[0].mxu0
    %v1142 = vadd.f32 %v553, %v1141
    %1143 = vmatprep.mubr.bf16.mxu0 %v449
    %1144 = vmatmul.mubr.bf16.gmra.mrb[0].mxu0 %v448
    %v1145 = vpop.f32.mrb[0].mxu0
    %v1146 = vadd.f32 %v549, %v1145
    %v1147 = vpop.f32.mrb[0].mxu0
    %v1148 = vadd.f32 %v553, %v1147
    %v1149 = vpop.f32.mrb[0].mxu0
    %v1150 = vadd.f32 %v549, %v1149
    %v1151 = vpop.f32.mrb[0].mxu0
    %v1152 = vadd.f32 %v553, %v1151
    %1153 = vmatprep.mubr.bf16.mxu0 %v451
    %1154 = vmatmul.mubr.bf16.gmra.mrb[0].mxu0 %v450
    %v1155 = vpop.f32.mrb[0].mxu0
    %v1156 = vadd.f32 %v549, %v1155
    %v1157 = vpop.f32.mrb[0].mxu0
    %v1158 = vadd.f32 %v553, %v1157
    %v1159 = vpop.f32.mrb[0].mxu0
    %v1160 = vadd.f32 %v549, %v1159
    %v1161 = vpop.f32.mrb[0].mxu0
    %v1162 = vadd.f32 %v553, %v1161
    %1163 = vmatprep.mubr.bf16.mxu0 %v453
    %1164 = vmatmul.mubr.bf16.gmra.mrb[0].mxu0 %v452
    %v1165 = vpop.f32.mrb[0].mxu0
    %v1166 = vadd.f32 %v549, %v1165
    %v1167 = vpop.f32.mrb[0].mxu0
    %v1168 = vadd.f32 %v553, %v1167
    %v1169 = vpop.f32.mrb[0].mxu0
    %v1170 = vadd.f32 %v549, %v1169
    %v1171 = vpop.f32.mrb[0].mxu0
    %v1172 = vadd.f32 %v553, %v1171
    %1173 = vmatprep.mubr.bf16.mxu0 %v455
    %1174 = vmatmul.mubr.bf16.gmra.mrb[0].mxu0 %v454
    %v1175 = vpop.f32.mrb[0].mxu0
    %v1176 = vadd.f32 %v549, %v1175
    %v1177 = vpop.f32.mrb[0].mxu0
    %v1178 = vadd.f32 %v553, %v1177
    %v1179 = vpop.f32.mrb[0].mxu0
    %v1180 = vadd.f32 %v549, %v1179
    %v1181 = vpop.f32.mrb[0].mxu0
    %v1182 = vadd.f32 %v553, %v1181
    %1183 = vmatprep.mubr.bf16.mxu0 %v457
    %1184 = vmatmul.mubr.bf16.gmra.mrb[0].mxu0 %v456
    %v1185 = vpop.f32.mrb[0].mxu0
    %v1186 = vadd.f32 %v549, %v1185
    %v1187 = vpop.f32.mrb[0].mxu0
    %v1188 = vadd.f32 %v553, %v1187
    %v1189 = vpop.f32.mrb[0].mxu0
    %v1190 = vadd.f32 %v549, %v1189
    %v1191 = vpop.f32.mrb[0].mxu0
    %v1192 = vadd.f32 %v553, %v1191
    %1193 = vmatprep.mubr.bf16.mxu0 %v459
    %1194 = vmatmul.mubr.bf16.gmra.mrb[0].mxu0 %v458
    %v1195 = vpop.f32.mrb[0].mxu0
    %v1196 = vadd.f32 %v549, %v1195
    %v1197 = vpop.f32.mrb[0].mxu0
    %v1198 = vadd.f32 %v553, %v1197
    %v1199 = vpop.f32.mrb[0].mxu0
    %v1200 = vadd.f32 %v549, %v1199
    %v1201 = vpop.f32.mrb[0].mxu0
    %v1202 = vadd.f32 %v553, %v1201
    %1203 = vmatprep.mubr.bf16.mxu0 %v461
    %1204 = vmatmul.mubr.bf16.gmra.mrb[0].mxu0 %v460
    %v1205 = vpop.f32.mrb[0].mxu0
    %v1206 = vadd.f32 %v549, %v1205
    %v1207 = vpop.f32.mrb[0].mxu0
    %v1208 = vadd.f32 %v553, %v1207
    %v1209 = vpop.f32.mrb[0].mxu0
    %v1210 = vadd.f32 %v549, %v1209
    %v1211 = vpop.f32.mrb[0].mxu0
    %v1212 = vadd.f32 %v553, %v1211
    %1213 = vmatprep.mubr.bf16.mxu0 %v463
    %1214 = vmatmul.mubr.bf16.gmra.mrb[0].mxu0 %v462
    %v1215 = vpop.f32.mrb[0].mxu0
    %v1216 = vadd.f32 %v549, %v1215
    %v1217 = vpop.f32.mrb[0].mxu0
    %v1218 = vadd.f32 %v553, %v1217
    %v1219 = vpop.f32.mrb[0].mxu0
    %v1220 = vadd.f32 %v549, %v1219
    %v1221 = vpop.f32.mrb[0].mxu0
    %v1222 = vadd.f32 %v553, %v1221
    %1223 = vmatprep.mubr.bf16.mxu0 %v465
    %1224 = vmatmul.mubr.bf16.gmra.mrb[0].mxu0 %v464
    %v1225 = vpop.f32.mrb[0].mxu0
    %v1226 = vadd.f32 %v549, %v1225
    %v1227 = vpop.f32.mrb[0].mxu0
    %v1228 = vadd.f32 %v553, %v1227
    %v1229 = vpop.f32.mrb[0].mxu0
    %v1230 = vadd.f32 %v549, %v1229
    %v1231 = vpop.f32.mrb[0].mxu0
    %v1232 = vadd.f32 %v553, %v1231
    %1233 = vmatprep.mubr.bf16.mxu0 %v467
    %1234 = vmatmul.mubr.bf16.gmra.mrb[0].mxu0 %v466
    %v1235 = vpop.f32.mrb[0].mxu0
    %v1236 = vadd.f32 %v549, %v1235
    %v1237 = vpop.f32.mrb[0].mxu0
    %v1238 = vadd.f32 %v553, %v1237
    %v1239 = vpop.f32.mrb[0].mxu0
    %v1240 = vadd.f32 %v549, %v1239
    %v1241 = vpop.f32.mrb[0].mxu0
    %v1242 = vadd.f32 %v553, %v1241
    %1243 = vmatprep.mubr.bf16.mxu0 %v469
    %1244 = vmatmul.mubr.bf16.gmra.mrb[0].mxu0 %v468
    %v1245 = vpop.f32.mrb[0].mxu0
    %v1246 = vadd.f32 %v549, %v1245
    %v1247 = vpop.f32.mrb[0].mxu0
    %v1248 = vadd.f32 %v553, %v1247
    %v1249 = vpop.f32.mrb[0].mxu0
    %v1250 = vadd.f32 %v549, %v1249
    %v1251 = vpop.f32.mrb[0].mxu0
    %v1252 = vadd.f32 %v553, %v1251
    %1253 = vmatprep.mubr.bf16.mxu0 %v471
    %1254 = vmatmul.mubr.bf16.gmra.mrb[0].mxu0 %v470
    %v1255 = vpop.f32.mrb[0].mxu0
    %v1256 = vadd.f32 %v549, %v1255
    %v1257 = vpop.f32.mrb[0].mxu0
    %v1258 = vadd.f32 %v553, %v1257
    %v1259 = vpop.f32.mrb[0].mxu0
    %v1260 = vadd.f32 %v549, %v1259
    %v1261 = vpop.f32.mrb[0].mxu0
    %v1262 = vadd.f32 %v553, %v1261
    %1263 = vdwg.mxu0
    %v1264 = vmax.f32 %v913, 0.0
    %v1265 = vmax.f32 %v915, 0.0
    %v1266 = vmax.f32 %v1106, 0.0
    %v1267 = vmax.f32 %v1108, 0.0
    %v1268 = vmax.f32 %v917, 0.0
    %v1269 = vmax.f32 %v919, 0.0
    %v1270 = vmax.f32 %v1110, 0.0
    %v1271 = vmax.f32 %v1112, 0.0
    %v1272 = vmax.f32 %v923, 0.0
    %v1273 = vmax.f32 %v925, 0.0
    %v1274 = vmax.f32 %v1116, 0.0
    %v1275 = vmax.f32 %v1118, 0.0
    %v1276 = vmax.f32 %v927, 0.0
    %v1277 = vmax.f32 %v929, 0.0
    %v1278 = vmax.f32 %v1120, 0.0
    %v1279 = vmax.f32 %v1122, 0.0
    %v1280 = vmax.f32 %v933, 0.0
    %v1281 = vmax.f32 %v935, 0.0
    %v1282 = vmax.f32 %v1126, 0.0
    %v1283 = vmax.f32 %v1128, 0.0
    %v1284 = vmax.f32 %v937, 0.0
    %v1285 = vmax.f32 %v939, 0.0
    %v1286 = vmax.f32 %v1130, 0.0
    %v1287 = vmax.f32 %v1132, 0.0
    %v1288 = vmax.f32 %v943, 0.0
    %v1289 = vmax.f32 %v945, 0.0
    %v1290 = vmax.f32 %v1136, 0.0
    %v1291 = vmax.f32 %v1138, 0.0
    %v1292 = vmax.f32 %v947, 0.0
    %v1293 = vmax.f32 %v949, 0.0
    %v1294 = vmax.f32 %v1140, 0.0
    %v1295 = vmax.f32 %v1142, 0.0
    %v1296 = vmax.f32 %v953, 0.0
    %v1297 = vmax.f32 %v955, 0.0
    %v1298 = vmax.f32 %v1146, 0.0
    %v1299 = vmax.f32 %v1148, 0.0
    %v1300 = vmax.f32 %v957, 0.0
    %v1301 = vmax.f32 %v959, 0.0
    %v1302 = vmax.f32 %v1150, 0.0
    %v1303 = vmax.f32 %v1152, 0.0
    %v1304 = vmax.f32 %v963, 0.0
    %v1305 = vmax.f32 %v965, 0.0
    %v1306 = vmax.f32 %v1156, 0.0
    %v1307 = vmax.f32 %v1158, 0.0
    %v1308 = vmax.f32 %v967, 0.0
    %v1309 = vmax.f32 %v969, 0.0
    %v1310 = vmax.f32 %v1160, 0.0
    %v1311 = vmax.f32 %v1162, 0.0
    %v1312 = vmax.f32 %v973, 0.0
    %v1313 = vmax.f32 %v975, 0.0
    %v1314 = vmax.f32 %v1166, 0.0
    %v1315 = vmax.f32 %v1168, 0.0
    %v1316 = vmax.f32 %v977, 0.0
    %v1317 = vmax.f32 %v979, 0.0
    %v1318 = vmax.f32 %v1170, 0.0
    %v1319 = vmax.f32 %v1172, 0.0
    %v1320 = vmax.f32 %v983, 0.0
    %v1321 = vmax.f32 %v985, 0.0
    %v1322 = vmax.f32 %v1176, 0.0
    %v1323 = vmax.f32 %v1178, 0.0
    %v1324 = vmax.f32 %v987, 0.0
    %v1325 = vmax.f32 %v989, 0.0
    %v1326 = vmax.f32 %v1180, 0.0
    %v1327 = vmax.f32 %v1182, 0.0
    %v1328 = vmax.f32 %v993, 0.0
    %v1329 = vmax.f32 %v995, 0.0
    %v1330 = vmax.f32 %v1186, 0.0
    %v1331 = vmax.f32 %v1188, 0.0
    %v1332 = vmax.f32 %v997, 0.0
    %v1333 = vmax.f32 %v999, 0.0
    %v1334 = vmax.f32 %v1190, 0.0
    %v1335 = vmax.f32 %v1192, 0.0
    %v1336 = vmax.f32 %v1003, 0.0
    %v1337 = vmax.f32 %v1005, 0.0
    %v1338 = vmax.f32 %v1196, 0.0
    %v1339 = vmax.f32 %v1198, 0.0
    %v1340 = vmax.f32 %v1007, 0.0
    %v1341 = vmax.f32 %v1009, 0.0
    %v1342 = vmax.f32 %v1200, 0.0
    %v1343 = vmax.f32 %v1202, 0.0
    %v1344 = vmax.f32 %v1013, 0.0
    %v1345 = vmax.f32 %v1015, 0.0
    %v1346 = vmax.f32 %v1206, 0.0
    %v1347 = vmax.f32 %v1208, 0.0
    %v1348 = vmax.f32 %v1017, 0.0
    %v1349 = vmax.f32 %v1019, 0.0
    %v1350 = vmax.f32 %v1210, 0.0
    %v1351 = vmax.f32 %v1212, 0.0
    %v1352 = vmax.f32 %v1023, 0.0
    %v1353 = vmax.f32 %v1025, 0.0
    %v1354 = vmax.f32 %v1216, 0.0
    %v1355 = vmax.f32 %v1218, 0.0
    %v1356 = vmax.f32 %v1027, 0.0
    %v1357 = vmax.f32 %v1029, 0.0
    %v1358 = vmax.f32 %v1220, 0.0
    %v1359 = vmax.f32 %v1222, 0.0
    %v1360 = vmax.f32 %v1033, 0.0
    %v1361 = vmax.f32 %v1035, 0.0
    %v1362 = vmax.f32 %v1226, 0.0
    %v1363 = vmax.f32 %v1228, 0.0
    %v1364 = vmax.f32 %v1037, 0.0
    %v1365 = vmax.f32 %v1039, 0.0
    %v1366 = vmax.f32 %v1230, 0.0
    %v1367 = vmax.f32 %v1232, 0.0
    %v1368 = vmax.f32 %v1043, 0.0
    %v1369 = vmax.f32 %v1045, 0.0
    %v1370 = vmax.f32 %v1236, 0.0
    %v1371 = vmax.f32 %v1238, 0.0
    %v1372 = vmax.f32 %v1047, 0.0
    %v1373 = vmax.f32 %v1049, 0.0
    %v1374 = vmax.f32 %v1240, 0.0
    %v1375 = vmax.f32 %v1242, 0.0
    %v1376 = vmax.f32 %v1053, 0.0
    %v1377 = vmax.f32 %v1055, 0.0
    %v1378 = vmax.f32 %v1246, 0.0
    %v1379 = vmax.f32 %v1248, 0.0
    %v1380 = vmax.f32 %v1057, 0.0
    %v1381 = vmax.f32 %v1059, 0.0
    %v1382 = vmax.f32 %v1250, 0.0
    %v1383 = vmax.f32 %v1252, 0.0
    %v1384 = vmax.f32 %v1063, 0.0
    %v1385 = vmax.f32 %v1065, 0.0
    %v1386 = vmax.f32 %v1256, 0.0
    %v1387 = vmax.f32 %v1258, 0.0
    %v1388 = vmax.f32 %v1067, 0.0
    %v1389 = vmax.f32 %v1069, 0.0
    %v1390 = vmax.f32 %v1260, 0.0
    %v1391 = vmax.f32 %v1262, 0.0
    %v1392 = vpack.c.bf16 %v1268, %v1264
    %v1393 = vpack.c.bf16 %v1269, %v1265
    %v1394 = vpack.c.bf16 %v1270, %v1266
    %v1395 = vpack.c.bf16 %v1271, %v1267
    %v1396 = vpack.c.bf16 %v1276, %v1272
    %v1397 = vpack.c.bf16 %v1277, %v1273
    %v1398 = vpack.c.bf16 %v1278, %v1274
    %v1399 = vpack.c.bf16 %v1279, %v1275
    %v1400 = vpack.c.bf16 %v1284, %v1280
    %v1401 = vpack.c.bf16 %v1285, %v1281
    %v1402 = vpack.c.bf16 %v1286, %v1282
    %v1403 = vpack.c.bf16 %v1287, %v1283
    %v1404 = vpack.c.bf16 %v1292, %v1288
    %v1405 = vpack.c.bf16 %v1293, %v1289
    %v1406 = vpack.c.bf16 %v1294, %v1290
    %v1407 = vpack.c.bf16 %v1295, %v1291
    %v1408 = vpack.c.bf16 %v1300, %v1296
    %v1409 = vpack.c.bf16 %v1301, %v1297
    %v1410 = vpack.c.bf16 %v1302, %v1298
    %v1411 = vpack.c.bf16 %v1303, %v1299
    %v1412 = vpack.c.bf16 %v1308, %v1304
    %v1413 = vpack.c.bf16 %v1309, %v1305
    %v1414 = vpack.c.bf16 %v1310, %v1306
    %v1415 = vpack.c.bf16 %v1311, %v1307
    %v1416 = vpack.c.bf16 %v1316, %v1312
    %v1417 = vpack.c.bf16 %v1317, %v1313
    %v1418 = vpack.c.bf16 %v1318, %v1314
    %v1419 = vpack.c.bf16 %v1319, %v1315
    %v1420 = vpack.c.bf16 %v1324, %v1320
    %v1421 = vpack.c.bf16 %v1325, %v1321
    %v1422 = vpack.c.bf16 %v1326, %v1322
    %v1423 = vpack.c.bf16 %v1327, %v1323
    %v1424 = vpack.c.bf16 %v1332, %v1328
    %v1425 = vpack.c.bf16 %v1333, %v1329
    %v1426 = vpack.c.bf16 %v1334, %v1330
    %v1427 = vpack.c.bf16 %v1335, %v1331
    %v1428 = vpack.c.bf16 %v1340, %v1336
    %v1429 = vpack.c.bf16 %v1341, %v1337
    %v1430 = vpack.c.bf16 %v1342, %v1338
    %v1431 = vpack.c.bf16 %v1343, %v1339
    %v1432 = vpack.c.bf16 %v1348, %v1344
    %v1433 = vpack.c.bf16 %v1349, %v1345
    %v1434 = vpack.c.bf16 %v1350, %v1346
    %v1435 = vpack.c.bf16 %v1351, %v1347
    %v1436 = vpack.c.bf16 %v1356, %v1352
    %v1437 = vpack.c.bf16 %v1357, %v1353
    %v1438 = vpack.c.bf16 %v1358, %v1354
    %v1439 = vpack.c.bf16 %v1359, %v1355
    %v1440 = vpack.c.bf16 %v1364, %v1360
    %v1441 = vpack.c.bf16 %v1365, %v1361
    %v1442 = vpack.c.bf16 %v1366, %v1362
    %v1443 = vpack.c.bf16 %v1367, %v1363
    %v1444 = vpack.c.bf16 %v1372, %v1368
    %v1445 = vpack.c.bf16 %v1373, %v1369
    %v1446 = vpack.c.bf16 %v1374, %v1370
    %v1447 = vpack.c.bf16 %v1375, %v1371
    %v1448 = vpack.c.bf16 %v1380, %v1376
    %v1449 = vpack.c.bf16 %v1381, %v1377
    %v1450 = vpack.c.bf16 %v1382, %v1378
    %v1451 = vpack.c.bf16 %v1383, %v1379
    %v1452 = vpack.c.bf16 %v1388, %v1384
    %v1453 = vpack.c.bf16 %v1389, %v1385
    %v1454 = vpack.c.bf16 %v1390, %v1386
    %v1455 = vpack.c.bf16 %v1391, %v1387
    %v1456 = vld [vmem:[#allocation4] sm:$0xff]
    %v1457 = vld [vmem:[#allocation4 + $0x8] sm:$0xff]
    %v1458 = vld [vmem:[#allocation4 + $0x10] sm:$0xff]
    %v1459 = vld [vmem:[#allocation4 + $0x18] sm:$0xff]
    %v1460 = vld [vmem:[#allocation4 + $0x20] sm:$0xff]
    %v1461 = vld [vmem:[#allocation4 + $0x28] sm:$0xff]
    %v1462 = vld [vmem:[#allocation4 + $0x30] sm:$0xff]
    %v1463 = vld [vmem:[#allocation4 + $0x38] sm:$0xff]
    %v1464 = vld [vmem:[#allocation4 + $0x40] sm:$0xff]
    %v1465 = vld [vmem:[#allocation4 + $0x48] sm:$0xff]
    %v1466 = vld [vmem:[#allocation4 + $0x50] sm:$0xff]
    %v1467 = vld [vmem:[#allocation4 + $0x58] sm:$0xff]
    %v1468 = vld [vmem:[#allocation4 + $0x60] sm:$0xff]
    %v1469 = vld [vmem:[#allocation4 + $0x68] sm:$0xff]
    %v1470 = vld [vmem:[#allocation4 + $0x70] sm:$0xff]
    %v1471 = vld [vmem:[#allocation4 + $0x78] sm:$0xff]
    %v1472 = vld [vmem:[#allocation4 + $0x80] sm:$0xff]
    %v1473 = vld [vmem:[#allocation4 + $0x88] sm:$0xff]
    %v1474 = vld [vmem:[#allocation4 + $0x90] sm:$0xff]
    %v1475 = vld [vmem:[#allocation4 + $0x98] sm:$0xff]
    %v1476 = vld [vmem:[#allocation4 + $0xa0] sm:$0xff]
    %v1477 = vld [vmem:[#allocation4 + $0xa8] sm:$0xff]
    %v1478 = vld [vmem:[#allocation4 + $0xb0] sm:$0xff]
    %v1479 = vld [vmem:[#allocation4 + $0xb8] sm:$0xff]
    %v1480 = vld [vmem:[#allocation4 + $0xc0] sm:$0xff]
    %v1481 = vld [vmem:[#allocation4 + $0xc8] sm:$0xff]
    %v1482 = vld [vmem:[#allocation4 + $0xd0] sm:$0xff]
    %v1483 = vld [vmem:[#allocation4 + $0xd8] sm:$0xff]
    %v1484 = vld [vmem:[#allocation4 + $0xe0] sm:$0xff]
    %v1485 = vld [vmem:[#allocation4 + $0xe8] sm:$0xff]
    %v1486 = vld [vmem:[#allocation4 + $0xf0] sm:$0xff]
    %v1487 = vld [vmem:[#allocation4 + $0xf8] sm:$0xff]
    %v1488 = vld [vmem:[#allocation4 + $0x100] sm:$0xff]
    %v1489 = vld [vmem:[#allocation4 + $0x108] sm:$0xff]
    %v1490 = vld [vmem:[#allocation4 + $0x110] sm:$0xff]
    %v1491 = vld [vmem:[#allocation4 + $0x118] sm:$0xff]
    %v1492 = vld [vmem:[#allocation4 + $0x120] sm:$0xff]
    %v1493 = vld [vmem:[#allocation4 + $0x128] sm:$0xff]
    %v1494 = vld [vmem:[#allocation4 + $0x130] sm:$0xff]
    %v1495 = vld [vmem:[#allocation4 + $0x138] sm:$0xff]
    %v1496 = vld [vmem:[#allocation4 + $0x140] sm:$0xff]
    %v1497 = vld [vmem:[#allocation4 + $0x148] sm:$0xff]
    %v1498 = vld [vmem:[#allocation4 + $0x150] sm:$0xff]
    %v1499 = vld [vmem:[#allocation4 + $0x158] sm:$0xff]
    %v1500 = vld [vmem:[#allocation4 + $0x160] sm:$0xff]
    %v1501 = vld [vmem:[#allocation4 + $0x168] sm:$0xff]
    %v1502 = vld [vmem:[#allocation4 + $0x170] sm:$0xff]
    %v1503 = vld [vmem:[#allocation4 + $0x178] sm:$0xff]
    %v1504 = vld [vmem:[#allocation4 + $0x180] sm:$0xff]
    %v1505 = vld [vmem:[#allocation4 + $0x188] sm:$0xff]
    %v1506 = vld [vmem:[#allocation4 + $0x190] sm:$0xff]
    %v1507 = vld [vmem:[#allocation4 + $0x198] sm:$0xff]
    %v1508 = vld [vmem:[#allocation4 + $0x1a0] sm:$0xff]
    %v1509 = vld [vmem:[#allocation4 + $0x1a8] sm:$0xff]
    %v1510 = vld [vmem:[#allocation4 + $0x1b0] sm:$0xff]
    %v1511 = vld [vmem:[#allocation4 + $0x1b8] sm:$0xff]
    %v1512 = vld [vmem:[#allocation4 + $0x1c0] sm:$0xff]
    %v1513 = vld [vmem:[#allocation4 + $0x1c8] sm:$0xff]
    %v1514 = vld [vmem:[#allocation4 + $0x1d0] sm:$0xff]
    %v1515 = vld [vmem:[#allocation4 + $0x1d8] sm:$0xff]
    %v1516 = vld [vmem:[#allocation4 + $0x1e0] sm:$0xff]
    %v1517 = vld [vmem:[#allocation4 + $0x1e8] sm:$0xff]
    %v1518 = vld [vmem:[#allocation4 + $0x1f0] sm:$0xff]
    %v1519 = vld [vmem:[#allocation4 + $0x1f8] sm:$0xff]
    %v1520 = vld [vmem:[%s6] sm:$0x3]
    %v1522 = vlaneseq
    %v1523 = vshrl.u32 %v1522, 7
    %v1524 = vsub.s32 0, %v1523
    %v1525 = vrot.slane %v1520, %v1524
    %v1526 = vlaneseq
    %v1527 = vshrl.u32 %v1526, 7
    %v1528 = vsub.s32 1, %v1527
    %v1529 = vrot.slane %v1520, %v1528
    %v1596 = vunpack.c.l.b16 %v1456
    %v1597 = vunpack.c.h.b16 %v1456
    %v1598 = vunpack.c.l.b16 %v1457
    %v1599 = vunpack.c.h.b16 %v1457
    %v1600 = vunpack.c.l.b16 %v1458
    %v1601 = vunpack.c.h.b16 %v1458
    %v1602 = vunpack.c.l.b16 %v1459
    %v1603 = vunpack.c.h.b16 %v1459
    %v1604 = vunpack.c.l.b16 %v1460
    %v1605 = vunpack.c.h.b16 %v1460
    %v1606 = vunpack.c.l.b16 %v1461
    %v1607 = vunpack.c.h.b16 %v1461
    %v1608 = vunpack.c.l.b16 %v1462
    %v1609 = vunpack.c.h.b16 %v1462
    %v1610 = vunpack.c.l.b16 %v1463
    %v1611 = vunpack.c.h.b16 %v1463
    %v1612 = vunpack.c.l.b16 %v1464
    %v1613 = vunpack.c.h.b16 %v1464
    %v1614 = vunpack.c.l.b16 %v1465
    %v1615 = vunpack.c.h.b16 %v1465
    %v1616 = vunpack.c.l.b16 %v1466
    %v1617 = vunpack.c.h.b16 %v1466
    %v1618 = vunpack.c.l.b16 %v1467
    %v1619 = vunpack.c.h.b16 %v1467
    %v1620 = vunpack.c.l.b16 %v1468
    %v1621 = vunpack.c.h.b16 %v1468
    %v1622 = vunpack.c.l.b16 %v1469
    %v1623 = vunpack.c.h.b16 %v1469
    %v1624 = vunpack.c.l.b16 %v1470
    %v1625 = vunpack.c.h.b16 %v1470
    %v1626 = vunpack.c.l.b16 %v1471
    %v1627 = vunpack.c.h.b16 %v1471
    %v1628 = vunpack.c.l.b16 %v1472
    %v1629 = vunpack.c.h.b16 %v1472
    %v1630 = vunpack.c.l.b16 %v1473
    %v1631 = vunpack.c.h.b16 %v1473
    %v1632 = vunpack.c.l.b16 %v1474
    %v1633 = vunpack.c.h.b16 %v1474
    %v1634 = vunpack.c.l.b16 %v1475
    %v1635 = vunpack.c.h.b16 %v1475
    %v1636 = vunpack.c.l.b16 %v1476
    %v1637 = vunpack.c.h.b16 %v1476
    %v1638 = vunpack.c.l.b16 %v1477
    %v1639 = vunpack.c.h.b16 %v1477
    %v1640 = vunpack.c.l.b16 %v1478
    %v1641 = vunpack.c.h.b16 %v1478
    %v1642 = vunpack.c.l.b16 %v1479
    %v1643 = vunpack.c.h.b16 %v1479
    %v1644 = vunpack.c.l.b16 %v1480
    %v1645 = vunpack.c.h.b16 %v1480
    %v1646 = vunpack.c.l.b16 %v1481
    %v1647 = vunpack.c.h.b16 %v1481
    %v1648 = vunpack.c.l.b16 %v1482
    %v1649 = vunpack.c.h.b16 %v1482
    %v1650 = vunpack.c.l.b16 %v1483
    %v1651 = vunpack.c.h.b16 %v1483
    %v1652 = vunpack.c.l.b16 %v1484
    %v1653 = vunpack.c.h.b16 %v1484
    %v1654 = vunpack.c.l.b16 %v1485
    %v1655 = vunpack.c.h.b16 %v1485
    %v1656 = vunpack.c.l.b16 %v1486
    %v1657 = vunpack.c.h.b16 %v1486
    %v1658 = vunpack.c.l.b16 %v1487
    %v1659 = vunpack.c.h.b16 %v1487
    %v1660 = vunpack.c.l.b16 %v1488
    %v1661 = vunpack.c.h.b16 %v1488
    %v1662 = vunpack.c.l.b16 %v1489
    %v1663 = vunpack.c.h.b16 %v1489
    %v1664 = vunpack.c.l.b16 %v1490
    %v1665 = vunpack.c.h.b16 %v1490
    %v1666 = vunpack.c.l.b16 %v1491
    %v1667 = vunpack.c.h.b16 %v1491
    %v1668 = vunpack.c.l.b16 %v1492
    %v1669 = vunpack.c.h.b16 %v1492
    %v1670 = vunpack.c.l.b16 %v1493
    %v1671 = vunpack.c.h.b16 %v1493
    %v1672 = vunpack.c.l.b16 %v1494
    %v1673 = vunpack.c.h.b16 %v1494
    %v1674 = vunpack.c.l.b16 %v1495
    %v1675 = vunpack.c.h.b16 %v1495
    %v1676 = vunpack.c.l.b16 %v1496
    %v1677 = vunpack.c.h.b16 %v1496
    %v1678 = vunpack.c.l.b16 %v1497
    %v1679 = vunpack.c.h.b16 %v1497
    %v1680 = vunpack.c.l.b16 %v1498
    %v1681 = vunpack.c.h.b16 %v1498
    %v1682 = vunpack.c.l.b16 %v1499
    %v1683 = vunpack.c.h.b16 %v1499
    %v1684 = vunpack.c.l.b16 %v1500
    %v1685 = vunpack.c.h.b16 %v1500
    %v1686 = vunpack.c.l.b16 %v1501
    %v1687 = vunpack.c.h.b16 %v1501
    %v1688 = vunpack.c.l.b16 %v1502
    %v1689 = vunpack.c.h.b16 %v1502
    %v1690 = vunpack.c.l.b16 %v1503
    %v1691 = vunpack.c.h.b16 %v1503
    %v1692 = vunpack.c.l.b16 %v1504
    %v1693 = vunpack.c.h.b16 %v1504
    %v1694 = vunpack.c.l.b16 %v1505
    %v1695 = vunpack.c.h.b16 %v1505
    %v1696 = vunpack.c.l.b16 %v1506
    %v1697 = vunpack.c.h.b16 %v1506
    %v1698 = vunpack.c.l.b16 %v1507
    %v1699 = vunpack.c.h.b16 %v1507
    %v1700 = vunpack.c.l.b16 %v1508
    %v1701 = vunpack.c.h.b16 %v1508
    %v1702 = vunpack.c.l.b16 %v1509
    %v1703 = vunpack.c.h.b16 %v1509
    %v1704 = vunpack.c.l.b16 %v1510
    %v1705 = vunpack.c.h.b16 %v1510
    %v1706 = vunpack.c.l.b16 %v1511
    %v1707 = vunpack.c.h.b16 %v1511
    %v1708 = vunpack.c.l.b16 %v1512
    %v1709 = vunpack.c.h.b16 %v1512
    %v1710 = vunpack.c.l.b16 %v1513
    %v1711 = vunpack.c.h.b16 %v1513
    %v1712 = vunpack.c.l.b16 %v1514
    %v1713 = vunpack.c.h.b16 %v1514
    %v1714 = vunpack.c.l.b16 %v1515
    %v1715 = vunpack.c.h.b16 %v1515
    %v1716 = vunpack.c.l.b16 %v1516
    %v1717 = vunpack.c.h.b16 %v1516
    %v1718 = vunpack.c.l.b16 %v1517
    %v1719 = vunpack.c.h.b16 %v1517
    %v1720 = vunpack.c.l.b16 %v1518
    %v1721 = vunpack.c.h.b16 %v1518
    %v1722 = vunpack.c.l.b16 %v1519
    %v1723 = vunpack.c.h.b16 %v1519
    %v1724 = vpack.c.b16 %v1598, %v1596
    %v1725 = vpack.c.b16 %v1599, %v1597
    %v1726 = vpack.c.b16 %v1602, %v1600
    %v1727 = vpack.c.b16 %v1603, %v1601
    %v1728 = vpack.c.b16 %v1606, %v1604
    %v1729 = vpack.c.b16 %v1607, %v1605
    %v1730 = vpack.c.b16 %v1610, %v1608
    %v1731 = vpack.c.b16 %v1611, %v1609
    %v1732 = vpack.c.b16 %v1614, %v1612
    %v1733 = vpack.c.b16 %v1615, %v1613
    %v1734 = vpack.c.b16 %v1618, %v1616
    %v1735 = vpack.c.b16 %v1619, %v1617
    %v1736 = vpack.c.b16 %v1622, %v1620
    %v1737 = vpack.c.b16 %v1623, %v1621
    %v1738 = vpack.c.b16 %v1626, %v1624
    %v1739 = vpack.c.b16 %v1627, %v1625
    %v1740 = vpack.c.b16 %v1630, %v1628
    %v1741 = vpack.c.b16 %v1631, %v1629
    %v1742 = vpack.c.b16 %v1634, %v1632
    %v1743 = vpack.c.b16 %v1635, %v1633
    %v1744 = vpack.c.b16 %v1638, %v1636
    %v1745 = vpack.c.b16 %v1639, %v1637
    %v1746 = vpack.c.b16 %v1642, %v1640
    %v1747 = vpack.c.b16 %v1643, %v1641
    %v1748 = vpack.c.b16 %v1646, %v1644
    %v1749 = vpack.c.b16 %v1647, %v1645
    %v1750 = vpack.c.b16 %v1650, %v1648
    %v1751 = vpack.c.b16 %v1651, %v1649
    %v1752 = vpack.c.b16 %v1654, %v1652
    %v1753 = vpack.c.b16 %v1655, %v1653
    %v1754 = vpack.c.b16 %v1658, %v1656
    %v1755 = vpack.c.b16 %v1659, %v1657
    %v1756 = vpack.c.b16 %v1662, %v1660
    %v1757 = vpack.c.b16 %v1663, %v1661
    %v1758 = vpack.c.b16 %v1666, %v1664
    %v1759 = vpack.c.b16 %v1667, %v1665
    %v1760 = vpack.c.b16 %v1670, %v1668
    %v1761 = vpack.c.b16 %v1671, %v1669
    %v1762 = vpack.c.b16 %v1674, %v1672
    %v1763 = vpack.c.b16 %v1675, %v1673
    %v1764 = vpack.c.b16 %v1678, %v1676
    %v1765 = vpack.c.b16 %v1679, %v1677
    %v1766 = vpack.c.b16 %v1682, %v1680
    %v1767 = vpack.c.b16 %v1683, %v1681
    %v1768 = vpack.c.b16 %v1686, %v1684
    %v1769 = vpack.c.b16 %v1687, %v1685
    %v1770 = vpack.c.b16 %v1690, %v1688
    %v1771 = vpack.c.b16 %v1691, %v1689
    %v1772 = vpack.c.b16 %v1694, %v1692
    %v1773 = vpack.c.b16 %v1695, %v1693
    %v1774 = vpack.c.b16 %v1698, %v1696
    %v1775 = vpack.c.b16 %v1699, %v1697
    %v1776 = vpack.c.b16 %v1702, %v1700
    %v1777 = vpack.c.b16 %v1703, %v1701
    %v1778 = vpack.c.b16 %v1706, %v1704
    %v1779 = vpack.c.b16 %v1707, %v1705
    %v1780 = vpack.c.b16 %v1710, %v1708
    %v1781 = vpack.c.b16 %v1711, %v1709
    %v1782 = vpack.c.b16 %v1714, %v1712
    %v1783 = vpack.c.b16 %v1715, %v1713
    %v1784 = vpack.c.b16 %v1718, %v1716
    %v1785 = vpack.c.b16 %v1719, %v1717
    %v1786 = vpack.c.b16 %v1722, %v1720
    %v1787 = vpack.c.b16 %v1723, %v1721
    %1852 = vmatprep.subr.bf16.mxu0 %v1725
    %1853 = vmatpush1.bf16.msra.mxu0 %v1724
    %1854 = vmatprep.subr.bf16.mxu0 %v1727
    %1855 = vmatpush1.bf16.msra.mxu0 %v1726
    %1856 = vmatprep.subr.bf16.mxu0 %v1729
    %1857 = vmatpush1.bf16.msra.mxu0 %v1728
    %1858 = vmatprep.subr.bf16.mxu0 %v1731
    %1859 = vmatpush1.bf16.msra.mxu0 %v1730
    %1860 = vmatprep.subr.bf16.mxu0 %v1733
    %1861 = vmatpush1.bf16.msra.mxu0 %v1732
    %1862 = vmatprep.subr.bf16.mxu0 %v1735
    %1863 = vmatpush1.bf16.msra.mxu0 %v1734
    %1864 = vmatprep.subr.bf16.mxu0 %v1737
    %1865 = vmatpush1.bf16.msra.mxu0 %v1736
    %1866 = vmatprep.subr.bf16.mxu0 %v1739
    %1867 = vmatpush1.bf16.msra.mxu0 %v1738
    %1868 = vmatprep.subr.bf16.mxu0 %v1741
    %1869 = vmatpush1.bf16.msra.mxu0 %v1740
    %1870 = vmatprep.subr.bf16.mxu0 %v1743
    %1871 = vmatpush1.bf16.msra.mxu0 %v1742
    %1872 = vmatprep.subr.bf16.mxu0 %v1745
    %1873 = vmatpush1.bf16.msra.mxu0 %v1744
    %1874 = vmatprep.subr.bf16.mxu0 %v1747
    %1875 = vmatpush1.bf16.msra.mxu0 %v1746
    %1876 = vmatprep.subr.bf16.mxu0 %v1749
    %1877 = vmatpush1.bf16.msra.mxu0 %v1748
    %1878 = vmatprep.subr.bf16.mxu0 %v1751
    %1879 = vmatpush1.bf16.msra.mxu0 %v1750
    %1880 = vmatprep.subr.bf16.mxu0 %v1753
    %1881 = vmatpush1.bf16.msra.mxu0 %v1752
    %1882 = vmatprep.subr.bf16.mxu0 %v1755
    %1883 = vmatpush1.bf16.msra.mxu0 %v1754
    %1884 = vmatprep.mubr.bf16.mxu0 %v1393
    %1885 = vmatmul.mubr.bf16.gmra.mrb[0].mxu0 %v1392
    %v1886 = vpop.f32.mrb[0].mxu0
    %v1887 = vadd.f32 %v1525, %v1886
    %v1888 = vpop.f32.mrb[0].mxu0
    %v1889 = vadd.f32 %v1529, %v1888
    %v1890 = vpop.f32.mrb[0].mxu0
    %v1891 = vadd.f32 %v1525, %v1890
    %v1892 = vpop.f32.mrb[0].mxu0
    %v1893 = vadd.f32 %v1529, %v1892
    %1894 = vmatprep.mubr.bf16.mxu0 %v1397
    %1895 = vmatmul.mubr.bf16.gmra.mrb[0].mxu0 %v1396
    %v1896 = vpop.f32.mrb[0].mxu0
    %v1897 = vadd.f32 %v1525, %v1896
    %v1898 = vpop.f32.mrb[0].mxu0
    %v1899 = vadd.f32 %v1529, %v1898
    %v1900 = vpop.f32.mrb[0].mxu0
    %v1901 = vadd.f32 %v1525, %v1900
    %v1902 = vpop.f32.mrb[0].mxu0
    %v1903 = vadd.f32 %v1529, %v1902
    %1904 = vmatprep.mubr.bf16.mxu0 %v1401
    %1905 = vmatmul.mubr.bf16.gmra.mrb[0].mxu0 %v1400
    %v1906 = vpop.f32.mrb[0].mxu0
    %v1907 = vadd.f32 %v1525, %v1906
    %v1908 = vpop.f32.mrb[0].mxu0
    %v1909 = vadd.f32 %v1529, %v1908
    %v1910 = vpop.f32.mrb[0].mxu0
    %v1911 = vadd.f32 %v1525, %v1910
    %v1912 = vpop.f32.mrb[0].mxu0
    %v1913 = vadd.f32 %v1529, %v1912
    %1914 = vmatprep.mubr.bf16.mxu0 %v1405
    %1915 = vmatmul.mubr.bf16.gmra.mrb[0].mxu0 %v1404
    %v1916 = vpop.f32.mrb[0].mxu0
    %v1917 = vadd.f32 %v1525, %v1916
    %v1918 = vpop.f32.mrb[0].mxu0
    %v1919 = vadd.f32 %v1529, %v1918
    %v1920 = vpop.f32.mrb[0].mxu0
    %v1921 = vadd.f32 %v1525, %v1920
    %v1922 = vpop.f32.mrb[0].mxu0
    %v1923 = vadd.f32 %v1529, %v1922
    %1924 = vmatprep.mubr.bf16.mxu0 %v1409
    %1925 = vmatmul.mubr.bf16.gmra.mrb[0].mxu0 %v1408
    %v1926 = vpop.f32.mrb[0].mxu0
    %v1927 = vadd.f32 %v1525, %v1926
    %v1928 = vpop.f32.mrb[0].mxu0
    %v1929 = vadd.f32 %v1529, %v1928
    %v1930 = vpop.f32.mrb[0].mxu0
    %v1931 = vadd.f32 %v1525, %v1930
    %v1932 = vpop.f32.mrb[0].mxu0
    %v1933 = vadd.f32 %v1529, %v1932
    %1934 = vmatprep.mubr.bf16.mxu0 %v1413
    %1935 = vmatmul.mubr.bf16.gmra.mrb[0].mxu0 %v1412
    %v1936 = vpop.f32.mrb[0].mxu0
    %v1937 = vadd.f32 %v1525, %v1936
    %v1938 = vpop.f32.mrb[0].mxu0
    %v1939 = vadd.f32 %v1529, %v1938
    %v1940 = vpop.f32.mrb[0].mxu0
    %v1941 = vadd.f32 %v1525, %v1940
    %v1942 = vpop.f32.mrb[0].mxu0
    %v1943 = vadd.f32 %v1529, %v1942
    %1944 = vmatprep.mubr.bf16.mxu0 %v1417
    %1945 = vmatmul.mubr.bf16.gmra.mrb[0].mxu0 %v1416
    %v1946 = vpop.f32.mrb[0].mxu0
    %v1947 = vadd.f32 %v1525, %v1946
    %v1948 = vpop.f32.mrb[0].mxu0
    %v1949 = vadd.f32 %v1529, %v1948
    %v1950 = vpop.f32.mrb[0].mxu0
    %v1951 = vadd.f32 %v1525, %v1950
    %v1952 = vpop.f32.mrb[0].mxu0
    %v1953 = vadd.f32 %v1529, %v1952
    %1954 = vmatprep.mubr.bf16.mxu0 %v1421
    %1955 = vmatmul.mubr.bf16.gmra.mrb[0].mxu0 %v1420
    %v1956 = vpop.f32.mrb[0].mxu0
    %v1957 = vadd.f32 %v1525, %v1956
    %v1958 = vpop.f32.mrb[0].mxu0
    %v1959 = vadd.f32 %v1529, %v1958
    %v1960 = vpop.f32.mrb[0].mxu0
    %v1961 = vadd.f32 %v1525, %v1960
    %v1962 = vpop.f32.mrb[0].mxu0
    %v1963 = vadd.f32 %v1529, %v1962
    %1964 = vmatprep.mubr.bf16.mxu0 %v1425
    %1965 = vmatmul.mubr.bf16.gmra.mrb[0].mxu0 %v1424
    %v1966 = vpop.f32.mrb[0].mxu0
    %v1967 = vadd.f32 %v1525, %v1966
    %v1968 = vpop.f32.mrb[0].mxu0
    %v1969 = vadd.f32 %v1529, %v1968
    %v1970 = vpop.f32.mrb[0].mxu0
    %v1971 = vadd.f32 %v1525, %v1970
    %v1972 = vpop.f32.mrb[0].mxu0
    %v1973 = vadd.f32 %v1529, %v1972
    %1974 = vmatprep.mubr.bf16.mxu0 %v1429
    %1975 = vmatmul.mubr.bf16.gmra.mrb[0].mxu0 %v1428
    %v1976 = vpop.f32.mrb[0].mxu0
    %v1977 = vadd.f32 %v1525, %v1976
    %v1978 = vpop.f32.mrb[0].mxu0
    %v1979 = vadd.f32 %v1529, %v1978
    %v1980 = vpop.f32.mrb[0].mxu0
    %v1981 = vadd.f32 %v1525, %v1980
    %v1982 = vpop.f32.mrb[0].mxu0
    %v1983 = vadd.f32 %v1529, %v1982
    %1984 = vmatprep.mubr.bf16.mxu0 %v1433
    %1985 = vmatmul.mubr.bf16.gmra.mrb[0].mxu0 %v1432
    %v1986 = vpop.f32.mrb[0].mxu0
    %v1987 = vadd.f32 %v1525, %v1986
    %v1988 = vpop.f32.mrb[0].mxu0
    %v1989 = vadd.f32 %v1529, %v1988
    %v1990 = vpop.f32.mrb[0].mxu0
    %v1991 = vadd.f32 %v1525, %v1990
    %v1992 = vpop.f32.mrb[0].mxu0
    %v1993 = vadd.f32 %v1529, %v1992
    %1994 = vmatprep.mubr.bf16.mxu0 %v1437
    %1995 = vmatmul.mubr.bf16.gmra.mrb[0].mxu0 %v1436
    %v1996 = vpop.f32.mrb[0].mxu0
    %v1997 = vadd.f32 %v1525, %v1996
    %v1998 = vpop.f32.mrb[0].mxu0
    %v1999 = vadd.f32 %v1529, %v1998
    %v2000 = vpop.f32.mrb[0].mxu0
    %v2001 = vadd.f32 %v1525, %v2000
    %v2002 = vpop.f32.mrb[0].mxu0
    %v2003 = vadd.f32 %v1529, %v2002
    %2004 = vmatprep.mubr.bf16.mxu0 %v1441
    %2005 = vmatmul.mubr.bf16.gmra.mrb[0].mxu0 %v1440
    %v2006 = vpop.f32.mrb[0].mxu0
    %v2007 = vadd.f32 %v1525, %v2006
    %v2008 = vpop.f32.mrb[0].mxu0
    %v2009 = vadd.f32 %v1529, %v2008
    %v2010 = vpop.f32.mrb[0].mxu0
    %v2011 = vadd.f32 %v1525, %v2010
    %v2012 = vpop.f32.mrb[0].mxu0
    %v2013 = vadd.f32 %v1529, %v2012
    %2014 = vmatprep.mubr.bf16.mxu0 %v1445
    %2015 = vmatmul.mubr.bf16.gmra.mrb[0].mxu0 %v1444
    %v2016 = vpop.f32.mrb[0].mxu0
    %v2017 = vadd.f32 %v1525, %v2016
    %v2018 = vpop.f32.mrb[0].mxu0
    %v2019 = vadd.f32 %v1529, %v2018
    %v2020 = vpop.f32.mrb[0].mxu0
    %v2021 = vadd.f32 %v1525, %v2020
    %v2022 = vpop.f32.mrb[0].mxu0
    %v2023 = vadd.f32 %v1529, %v2022
    %2024 = vmatprep.mubr.bf16.mxu0 %v1449
    %2025 = vmatmul.mubr.bf16.gmra.mrb[0].mxu0 %v1448
    %v2026 = vpop.f32.mrb[0].mxu0
    %v2027 = vadd.f32 %v1525, %v2026
    %v2028 = vpop.f32.mrb[0].mxu0
    %v2029 = vadd.f32 %v1529, %v2028
    %v2030 = vpop.f32.mrb[0].mxu0
    %v2031 = vadd.f32 %v1525, %v2030
    %v2032 = vpop.f32.mrb[0].mxu0
    %v2033 = vadd.f32 %v1529, %v2032
    %2034 = vmatprep.mubr.bf16.mxu0 %v1453
    %2035 = vmatmul.mubr.bf16.gmra.mrb[0].mxu0 %v1452
    %v2036 = vpop.f32.mrb[0].mxu0
    %v2037 = vadd.f32 %v1525, %v2036
    %v2038 = vpop.f32.mrb[0].mxu0
    %v2039 = vadd.f32 %v1529, %v2038
    %v2040 = vpop.f32.mrb[0].mxu0
    %v2041 = vadd.f32 %v1525, %v2040
    %v2042 = vpop.f32.mrb[0].mxu0
    %v2043 = vadd.f32 %v1529, %v2042
    %2044 = vdwg.mxu0
    %2045 = vmatprep.subr.bf16.mxu0 %v1757
    %2046 = vmatpush1.bf16.msra.mxu0 %v1756
    %2047 = vmatprep.subr.bf16.mxu0 %v1759
    %2048 = vmatpush1.bf16.msra.mxu0 %v1758
    %2049 = vmatprep.subr.bf16.mxu0 %v1761
    %2050 = vmatpush1.bf16.msra.mxu0 %v1760
    %2051 = vmatprep.subr.bf16.mxu0 %v1763
    %2052 = vmatpush1.bf16.msra.mxu0 %v1762
    %2053 = vmatprep.subr.bf16.mxu0 %v1765
    %2054 = vmatpush1.bf16.msra.mxu0 %v1764
    %2055 = vmatprep.subr.bf16.mxu0 %v1767
    %2056 = vmatpush1.bf16.msra.mxu0 %v1766
    %2057 = vmatprep.subr.bf16.mxu0 %v1769
    %2058 = vmatpush1.bf16.msra.mxu0 %v1768
    %2059 = vmatprep.subr.bf16.mxu0 %v1771
    %2060 = vmatpush1.bf16.msra.mxu0 %v1770
    %2061 = vmatprep.subr.bf16.mxu0 %v1773
    %2062 = vmatpush1.bf16.msra.mxu0 %v1772
    %2063 = vmatprep.subr.bf16.mxu0 %v1775
    %2064 = vmatpush1.bf16.msra.mxu0 %v1774
    %2065 = vmatprep.subr.bf16.mxu0 %v1777
    %2066 = vmatpush1.bf16.msra.mxu0 %v1776
    %2067 = vmatprep.subr.bf16.mxu0 %v1779
    %2068 = vmatpush1.bf16.msra.mxu0 %v1778
    %2069 = vmatprep.subr.bf16.mxu0 %v1781
    %2070 = vmatpush1.bf16.msra.mxu0 %v1780
    %2071 = vmatprep.subr.bf16.mxu0 %v1783
    %2072 = vmatpush1.bf16.msra.mxu0 %v1782
    %2073 = vmatprep.subr.bf16.mxu0 %v1785
    %2074 = vmatpush1.bf16.msra.mxu0 %v1784
    %2075 = vmatprep.subr.bf16.mxu0 %v1787
    %2076 = vmatpush1.bf16.msra.mxu0 %v1786
    %2077 = vmatprep.mubr.bf16.mxu0 %v1395
    %2078 = vmatmul.mubr.bf16.gmra.mrb[0].mxu0 %v1394
    %v2079 = vpop.f32.mrb[0].mxu0
    %v2080 = vadd.f32 %v1887, %v2079
    %v2081 = vpop.f32.mrb[0].mxu0
    %v2082 = vadd.f32 %v1889, %v2081
    %v2083 = vpop.f32.mrb[0].mxu0
    %v2084 = vadd.f32 %v1891, %v2083
    %v2085 = vpop.f32.mrb[0].mxu0
    %v2086 = vadd.f32 %v1893, %v2085
    %2087 = vmatprep.mubr.bf16.mxu0 %v1399
    %2088 = vmatmul.mubr.bf16.gmra.mrb[0].mxu0 %v1398
    %v2089 = vpop.f32.mrb[0].mxu0
    %v2090 = vadd.f32 %v1897, %v2089
    %v2091 = vpop.f32.mrb[0].mxu0
    %v2092 = vadd.f32 %v1899, %v2091
    %v2093 = vpop.f32.mrb[0].mxu0
    %v2094 = vadd.f32 %v1901, %v2093
    %v2095 = vpop.f32.mrb[0].mxu0
    %v2096 = vadd.f32 %v1903, %v2095
    %2097 = vmatprep.mubr.bf16.mxu0 %v1403
    %2098 = vmatmul.mubr.bf16.gmra.mrb[0].mxu0 %v1402
    %v2099 = vpop.f32.mrb[0].mxu0
    %v2100 = vadd.f32 %v1907, %v2099
    %v2101 = vpop.f32.mrb[0].mxu0
    %v2102 = vadd.f32 %v1909, %v2101
    %v2103 = vpop.f32.mrb[0].mxu0
    %v2104 = vadd.f32 %v1911, %v2103
    %v2105 = vpop.f32.mrb[0].mxu0
    %v2106 = vadd.f32 %v1913, %v2105
    %2107 = vmatprep.mubr.bf16.mxu0 %v1407
    %2108 = vmatmul.mubr.bf16.gmra.mrb[0].mxu0 %v1406
    %v2109 = vpop.f32.mrb[0].mxu0
    %v2110 = vadd.f32 %v1917, %v2109
    %v2111 = vpop.f32.mrb[0].mxu0
    %v2112 = vadd.f32 %v1919, %v2111
    %v2113 = vpop.f32.mrb[0].mxu0
    %v2114 = vadd.f32 %v1921, %v2113
    %v2115 = vpop.f32.mrb[0].mxu0
    %v2116 = vadd.f32 %v1923, %v2115
    %2117 = vmatprep.mubr.bf16.mxu0 %v1411
    %2118 = vmatmul.mubr.bf16.gmra.mrb[0].mxu0 %v1410
    %v2119 = vpop.f32.mrb[0].mxu0
    %v2120 = vadd.f32 %v1927, %v2119
    %v2121 = vpop.f32.mrb[0].mxu0
    %v2122 = vadd.f32 %v1929, %v2121
    %v2123 = vpop.f32.mrb[0].mxu0
    %v2124 = vadd.f32 %v1931, %v2123
    %v2125 = vpop.f32.mrb[0].mxu0
    %v2126 = vadd.f32 %v1933, %v2125
    %2127 = vmatprep.mubr.bf16.mxu0 %v1415
    %2128 = vmatmul.mubr.bf16.gmra.mrb[0].mxu0 %v1414
    %v2129 = vpop.f32.mrb[0].mxu0
    %v2130 = vadd.f32 %v1937, %v2129
    %v2131 = vpop.f32.mrb[0].mxu0
    %v2132 = vadd.f32 %v1939, %v2131
    %v2133 = vpop.f32.mrb[0].mxu0
    %v2134 = vadd.f32 %v1941, %v2133
    %v2135 = vpop.f32.mrb[0].mxu0
    %v2136 = vadd.f32 %v1943, %v2135
    %2137 = vmatprep.mubr.bf16.mxu0 %v1419
    %2138 = vmatmul.mubr.bf16.gmra.mrb[0].mxu0 %v1418
    %v2139 = vpop.f32.mrb[0].mxu0
    %v2140 = vadd.f32 %v1947, %v2139
    %v2141 = vpop.f32.mrb[0].mxu0
    %v2142 = vadd.f32 %v1949, %v2141
    %v2143 = vpop.f32.mrb[0].mxu0
    %v2144 = vadd.f32 %v1951, %v2143
    %v2145 = vpop.f32.mrb[0].mxu0
    %v2146 = vadd.f32 %v1953, %v2145
    %2147 = vmatprep.mubr.bf16.mxu0 %v1423
    %2148 = vmatmul.mubr.bf16.gmra.mrb[0].mxu0 %v1422
    %v2149 = vpop.f32.mrb[0].mxu0
    %v2150 = vadd.f32 %v1957, %v2149
    %v2151 = vpop.f32.mrb[0].mxu0
    %v2152 = vadd.f32 %v1959, %v2151
    %v2153 = vpop.f32.mrb[0].mxu0
    %v2154 = vadd.f32 %v1961, %v2153
    %v2155 = vpop.f32.mrb[0].mxu0
    %v2156 = vadd.f32 %v1963, %v2155
    %2157 = vmatprep.mubr.bf16.mxu0 %v1427
    %2158 = vmatmul.mubr.bf16.gmra.mrb[0].mxu0 %v1426
    %v2159 = vpop.f32.mrb[0].mxu0
    %v2160 = vadd.f32 %v1967, %v2159
    %v2161 = vpop.f32.mrb[0].mxu0
    %v2162 = vadd.f32 %v1969, %v2161
    %v2163 = vpop.f32.mrb[0].mxu0
    %v2164 = vadd.f32 %v1971, %v2163
    %v2165 = vpop.f32.mrb[0].mxu0
    %v2166 = vadd.f32 %v1973, %v2165
    %2167 = vmatprep.mubr.bf16.mxu0 %v1431
    %2168 = vmatmul.mubr.bf16.gmra.mrb[0].mxu0 %v1430
    %v2169 = vpop.f32.mrb[0].mxu0
    %v2170 = vadd.f32 %v1977, %v2169
    %v2171 = vpop.f32.mrb[0].mxu0
    %v2172 = vadd.f32 %v1979, %v2171
    %v2173 = vpop.f32.mrb[0].mxu0
    %v2174 = vadd.f32 %v1981, %v2173
    %v2175 = vpop.f32.mrb[0].mxu0
    %v2176 = vadd.f32 %v1983, %v2175
    %2177 = vmatprep.mubr.bf16.mxu0 %v1435
    %2178 = vmatmul.mubr.bf16.gmra.mrb[0].mxu0 %v1434
    %v2179 = vpop.f32.mrb[0].mxu0
    %v2180 = vadd.f32 %v1987, %v2179
    %v2181 = vpop.f32.mrb[0].mxu0
    %v2182 = vadd.f32 %v1989, %v2181
    %v2183 = vpop.f32.mrb[0].mxu0
    %v2184 = vadd.f32 %v1991, %v2183
    %v2185 = vpop.f32.mrb[0].mxu0
    %v2186 = vadd.f32 %v1993, %v2185
    %2187 = vmatprep.mubr.bf16.mxu0 %v1439
    %2188 = vmatmul.mubr.bf16.gmra.mrb[0].mxu0 %v1438
    %v2189 = vpop.f32.mrb[0].mxu0
    %v2190 = vadd.f32 %v1997, %v2189
    %v2191 = vpop.f32.mrb[0].mxu0
    %v2192 = vadd.f32 %v1999, %v2191
    %v2193 = vpop.f32.mrb[0].mxu0
    %v2194 = vadd.f32 %v2001, %v2193
    %v2195 = vpop.f32.mrb[0].mxu0
    %v2196 = vadd.f32 %v2003, %v2195
    %2197 = vmatprep.mubr.bf16.mxu0 %v1443
    %2198 = vmatmul.mubr.bf16.gmra.mrb[0].mxu0 %v1442
    %v2199 = vpop.f32.mrb[0].mxu0
    %v2200 = vadd.f32 %v2007, %v2199
    %v2201 = vpop.f32.mrb[0].mxu0
    %v2202 = vadd.f32 %v2009, %v2201
    %v2203 = vpop.f32.mrb[0].mxu0
    %v2204 = vadd.f32 %v2011, %v2203
    %v2205 = vpop.f32.mrb[0].mxu0
    %v2206 = vadd.f32 %v2013, %v2205
    %2207 = vmatprep.mubr.bf16.mxu0 %v1447
    %2208 = vmatmul.mubr.bf16.gmra.mrb[0].mxu0 %v1446
    %v2209 = vpop.f32.mrb[0].mxu0
    %v2210 = vadd.f32 %v2017, %v2209
    %v2211 = vpop.f32.mrb[0].mxu0
    %v2212 = vadd.f32 %v2019, %v2211
    %v2213 = vpop.f32.mrb[0].mxu0
    %v2214 = vadd.f32 %v2021, %v2213
    %v2215 = vpop.f32.mrb[0].mxu0
    %v2216 = vadd.f32 %v2023, %v2215
    %2217 = vmatprep.mubr.bf16.mxu0 %v1451
    %2218 = vmatmul.mubr.bf16.gmra.mrb[0].mxu0 %v1450
    %v2219 = vpop.f32.mrb[0].mxu0
    %v2220 = vadd.f32 %v2027, %v2219
    %v2221 = vpop.f32.mrb[0].mxu0
    %v2222 = vadd.f32 %v2029, %v2221
    %v2223 = vpop.f32.mrb[0].mxu0
    %v2224 = vadd.f32 %v2031, %v2223
    %v2225 = vpop.f32.mrb[0].mxu0
    %v2226 = vadd.f32 %v2033, %v2225
    %2227 = vmatprep.mubr.bf16.mxu0 %v1455
    %2228 = vmatmul.mubr.bf16.gmra.mrb[0].mxu0 %v1454
    %v2229 = vpop.f32.mrb[0].mxu0
    %v2230 = vadd.f32 %v2037, %v2229
    %v2231 = vpop.f32.mrb[0].mxu0
    %v2232 = vadd.f32 %v2039, %v2231
    %v2233 = vpop.f32.mrb[0].mxu0
    %v2234 = vadd.f32 %v2041, %v2233
    %v2235 = vpop.f32.mrb[0].mxu0
    %v2236 = vadd.f32 %v2043, %v2235
    %2237 = vdwg.mxu0
    %v2238 = vmax.f32 %v2080, 0.0
    %v2239 = vmax.f32 %v2082, 0.0
    %v2240 = vmax.f32 %v2084, 0.0
    %v2241 = vmax.f32 %v2086, 0.0
    %v2242 = vmax.f32 %v2090, 0.0
    %v2243 = vmax.f32 %v2092, 0.0
    %v2244 = vmax.f32 %v2094, 0.0
    %v2245 = vmax.f32 %v2096, 0.0
    %v2246 = vmax.f32 %v2100, 0.0
    %v2247 = vmax.f32 %v2102, 0.0
    %v2248 = vmax.f32 %v2104, 0.0
    %v2249 = vmax.f32 %v2106, 0.0
    %v2250 = vmax.f32 %v2110, 0.0
    %v2251 = vmax.f32 %v2112, 0.0
    %v2252 = vmax.f32 %v2114, 0.0
    %v2253 = vmax.f32 %v2116, 0.0
    %v2254 = vmax.f32 %v2120, 0.0
    %v2255 = vmax.f32 %v2122, 0.0
    %v2256 = vmax.f32 %v2124, 0.0
    %v2257 = vmax.f32 %v2126, 0.0
    %v2258 = vmax.f32 %v2130, 0.0
    %v2259 = vmax.f32 %v2132, 0.0
    %v2260 = vmax.f32 %v2134, 0.0
    %v2261 = vmax.f32 %v2136, 0.0
    %v2262 = vmax.f32 %v2140, 0.0
    %v2263 = vmax.f32 %v2142, 0.0
    %v2264 = vmax.f32 %v2144, 0.0
    %v2265 = vmax.f32 %v2146, 0.0
    %v2266 = vmax.f32 %v2150, 0.0
    %v2267 = vmax.f32 %v2152, 0.0
    %v2268 = vmax.f32 %v2154, 0.0
    %v2269 = vmax.f32 %v2156, 0.0
    %v2270 = vmax.f32 %v2160, 0.0
    %v2271 = vmax.f32 %v2162, 0.0
    %v2272 = vmax.f32 %v2164, 0.0
    %v2273 = vmax.f32 %v2166, 0.0
    %v2274 = vmax.f32 %v2170, 0.0
    %v2275 = vmax.f32 %v2172, 0.0
    %v2276 = vmax.f32 %v2174, 0.0
    %v2277 = vmax.f32 %v2176, 0.0
    %v2278 = vmax.f32 %v2180, 0.0
    %v2279 = vmax.f32 %v2182, 0.0
    %v2280 = vmax.f32 %v2184, 0.0
    %v2281 = vmax.f32 %v2186, 0.0
    %v2282 = vmax.f32 %v2190, 0.0
    %v2283 = vmax.f32 %v2192, 0.0
    %v2284 = vmax.f32 %v2194, 0.0
    %v2285 = vmax.f32 %v2196, 0.0
    %v2286 = vmax.f32 %v2200, 0.0
    %v2287 = vmax.f32 %v2202, 0.0
    %v2288 = vmax.f32 %v2204, 0.0
    %v2289 = vmax.f32 %v2206, 0.0
    %v2290 = vmax.f32 %v2210, 0.0
    %v2291 = vmax.f32 %v2212, 0.0
    %v2292 = vmax.f32 %v2214, 0.0
    %v2293 = vmax.f32 %v2216, 0.0
    %v2294 = vmax.f32 %v2220, 0.0
    %v2295 = vmax.f32 %v2222, 0.0
    %v2296 = vmax.f32 %v2224, 0.0
    %v2297 = vmax.f32 %v2226, 0.0
    %v2298 = vmax.f32 %v2230, 0.0
    %v2299 = vmax.f32 %v2232, 0.0
    %v2300 = vmax.f32 %v2234, 0.0
    %v2301 = vmax.f32 %v2236, 0.0
    %v2302 = vpack.c.bf16 %v2240, %v2238
    %v2303 = vpack.c.bf16 %v2241, %v2239
    %v2304 = vpack.c.bf16 %v2244, %v2242
    %v2305 = vpack.c.bf16 %v2245, %v2243
    %v2306 = vpack.c.bf16 %v2248, %v2246
    %v2307 = vpack.c.bf16 %v2249, %v2247
    %v2308 = vpack.c.bf16 %v2252, %v2250
    %v2309 = vpack.c.bf16 %v2253, %v2251
    %v2310 = vpack.c.bf16 %v2256, %v2254
    %v2311 = vpack.c.bf16 %v2257, %v2255
    %v2312 = vpack.c.bf16 %v2260, %v2258
    %v2313 = vpack.c.bf16 %v2261, %v2259
    %v2314 = vpack.c.bf16 %v2264, %v2262
    %v2315 = vpack.c.bf16 %v2265, %v2263
    %v2316 = vpack.c.bf16 %v2268, %v2266
    %v2317 = vpack.c.bf16 %v2269, %v2267
    %v2318 = vpack.c.bf16 %v2272, %v2270
    %v2319 = vpack.c.bf16 %v2273, %v2271
    %v2320 = vpack.c.bf16 %v2276, %v2274
    %v2321 = vpack.c.bf16 %v2277, %v2275
    %v2322 = vpack.c.bf16 %v2280, %v2278
    %v2323 = vpack.c.bf16 %v2281, %v2279
    %v2324 = vpack.c.bf16 %v2284, %v2282
    %v2325 = vpack.c.bf16 %v2285, %v2283
    %v2326 = vpack.c.bf16 %v2288, %v2286
    %v2327 = vpack.c.bf16 %v2289, %v2287
    %v2328 = vpack.c.bf16 %v2292, %v2290
    %v2329 = vpack.c.bf16 %v2293, %v2291
    %v2330 = vpack.c.bf16 %v2296, %v2294
    %v2331 = vpack.c.bf16 %v2297, %v2295
    %v2332 = vpack.c.bf16 %v2300, %v2298
    %v2333 = vpack.c.bf16 %v2301, %v2299
    %v2334 = vld [vmem:[%s7] sm:$0xf]
    %v2335 = vld [vmem:[%s7 + $0x4] sm:$0xf]
    %v2336 = vld [vmem:[%s7 + $0x8] sm:$0xf]
    %v2337 = vld [vmem:[%s7 + $0xc] sm:$0xf]
    %v2338 = vld [vmem:[%s7 + $0x10] sm:$0xf]
    %v2339 = vld [vmem:[%s7 + $0x14] sm:$0xf]
    %v2340 = vld [vmem:[%s7 + $0x18] sm:$0xf]
    %v2341 = vld [vmem:[%s7 + $0x1c] sm:$0xf]
    %v2342 = vld [vmem:[%s7 + $0x20] sm:$0xf]
    %v2343 = vld [vmem:[%s7 + $0x24] sm:$0xf]
    %v2344 = vld [vmem:[%s7 + $0x28] sm:$0xf]
    %v2345 = vld [vmem:[%s7 + $0x2c] sm:$0xf]
    %v2346 = vld [vmem:[%s7 + $0x30] sm:$0xf]
    %v2347 = vld [vmem:[%s7 + $0x34] sm:$0xf]
    %v2348 = vld [vmem:[%s7 + $0x38] sm:$0xf]
    %v2349 = vld [vmem:[%s7 + $0x3c] sm:$0xf]
    %v2350 = vld [vmem:[%s7 + $0x40] sm:$0xf]
    %v2351 = vld [vmem:[%s7 + $0x44] sm:$0xf]
    %v2352 = vld [vmem:[%s7 + $0x48] sm:$0xf]
    %v2353 = vld [vmem:[%s7 + $0x4c] sm:$0xf]
    %v2354 = vld [vmem:[%s7 + $0x50] sm:$0xf]
    %v2355 = vld [vmem:[%s7 + $0x54] sm:$0xf]
    %v2356 = vld [vmem:[%s7 + $0x58] sm:$0xf]
    %v2357 = vld [vmem:[%s7 + $0x5c] sm:$0xf]
    %v2358 = vld [vmem:[%s7 + $0x60] sm:$0xf]
    %v2359 = vld [vmem:[%s7 + $0x64] sm:$0xf]
    %v2360 = vld [vmem:[%s7 + $0x68] sm:$0xf]
    %v2361 = vld [vmem:[%s7 + $0x6c] sm:$0xf]
    %v2362 = vld [vmem:[%s7 + $0x70] sm:$0xf]
    %v2363 = vld [vmem:[%s7 + $0x74] sm:$0xf]
    %v2364 = vld [vmem:[%s7 + $0x78] sm:$0xf]
    %v2365 = vld [vmem:[%s7 + $0x7c] sm:$0xf]
    %v2366 = vld [vmem:[%s8] sm:$0x1]
    %v2368 = vlaneseq
    %v2369 = vshrl.u32 %v2368, 7
    %v2370 = vsub.s32 0, %v2369
    %v2371 = vrot.slane %v2366, %v2370
    %v2405 = vunpack.c.l.b16 %v2334
    %v2406 = vunpack.c.l.b16 %v2335
    %v2407 = vunpack.c.l.b16 %v2336
    %v2408 = vunpack.c.l.b16 %v2337
    %v2409 = vunpack.c.l.b16 %v2338
    %v2410 = vunpack.c.l.b16 %v2339
    %v2411 = vunpack.c.l.b16 %v2340
    %v2412 = vunpack.c.l.b16 %v2341
    %v2413 = vunpack.c.l.b16 %v2342
    %v2414 = vunpack.c.l.b16 %v2343
    %v2415 = vunpack.c.l.b16 %v2344
    %v2416 = vunpack.c.l.b16 %v2345
    %v2417 = vunpack.c.l.b16 %v2346
    %v2418 = vunpack.c.l.b16 %v2347
    %v2419 = vunpack.c.l.b16 %v2348
    %v2420 = vunpack.c.l.b16 %v2349
    %v2421 = vunpack.c.l.b16 %v2350
    %v2422 = vunpack.c.l.b16 %v2351
    %v2423 = vunpack.c.l.b16 %v2352
    %v2424 = vunpack.c.l.b16 %v2353
    %v2425 = vunpack.c.l.b16 %v2354
    %v2426 = vunpack.c.l.b16 %v2355
    %v2427 = vunpack.c.l.b16 %v2356
    %v2428 = vunpack.c.l.b16 %v2357
    %v2429 = vunpack.c.l.b16 %v2358
    %v2430 = vunpack.c.l.b16 %v2359
    %v2431 = vunpack.c.l.b16 %v2360
    %v2432 = vunpack.c.l.b16 %v2361
    %v2433 = vunpack.c.l.b16 %v2362
    %v2434 = vunpack.c.l.b16 %v2363
    %v2435 = vunpack.c.l.b16 %v2364
    %v2436 = vunpack.c.l.b16 %v2365
    %v2437 = vpack.c.b16 %v2406, %v2405
    %v2438 = vpack.c.b16 %v2408, %v2407
    %v2439 = vpack.c.b16 %v2410, %v2409
    %v2440 = vpack.c.b16 %v2412, %v2411
    %v2441 = vpack.c.b16 %v2414, %v2413
    %v2442 = vpack.c.b16 %v2416, %v2415
    %v2443 = vpack.c.b16 %v2418, %v2417
    %v2444 = vpack.c.b16 %v2420, %v2419
    %v2445 = vpack.c.b16 %v2422, %v2421
    %v2446 = vpack.c.b16 %v2424, %v2423
    %v2447 = vpack.c.b16 %v2426, %v2425
    %v2448 = vpack.c.b16 %v2428, %v2427
    %v2449 = vpack.c.b16 %v2430, %v2429
    %v2450 = vpack.c.b16 %v2432, %v2431
    %v2451 = vpack.c.b16 %v2434, %v2433
    %v2452 = vpack.c.b16 %v2436, %v2435
    %2469 = vmatprep.subr.bf16.mxu0 0
    %2470 = vmatpush1.bf16.msra.mxu0 %v2437
    %2471 = vmatprep.subr.bf16.mxu0 0
    %2472 = vmatpush1.bf16.msra.mxu0 %v2438
    %2473 = vmatprep.subr.bf16.mxu0 0
    %2474 = vmatpush1.bf16.msra.mxu0 %v2439
    %2475 = vmatprep.subr.bf16.mxu0 0
    %2476 = vmatpush1.bf16.msra.mxu0 %v2440
    %2477 = vmatprep.subr.bf16.mxu0 0
    %2478 = vmatpush1.bf16.msra.mxu0 %v2441
    %2479 = vmatprep.subr.bf16.mxu0 0
    %2480 = vmatpush1.bf16.msra.mxu0 %v2442
    %2481 = vmatprep.subr.bf16.mxu0 0
    %2482 = vmatpush1.bf16.msra.mxu0 %v2443
    %2483 = vmatprep.subr.bf16.mxu0 0
    %2484 = vmatpush1.bf16.msra.mxu0 %v2444
    %2485 = vmatprep.subr.bf16.mxu0 0
    %2486 = vmatpush1.bf16.msra.mxu0 %v2445
    %2487 = vmatprep.subr.bf16.mxu0 0
    %2488 = vmatpush1.bf16.msra.mxu0 %v2446
    %2489 = vmatprep.subr.bf16.mxu0 0
    %2490 = vmatpush1.bf16.msra.mxu0 %v2447
    %2491 = vmatprep.subr.bf16.mxu0 0
    %2492 = vmatpush1.bf16.msra.mxu0 %v2448
    %2493 = vmatprep.subr.bf16.mxu0 0
    %2494 = vmatpush1.bf16.msra.mxu0 %v2449
    %2495 = vmatprep.subr.bf16.mxu0 0
    %2496 = vmatpush1.bf16.msra.mxu0 %v2450
    %2497 = vmatprep.subr.bf16.mxu0 0
    %2498 = vmatpush1.bf16.msra.mxu0 %v2451
    %2499 = vmatprep.subr.bf16.mxu0 0
    %2500 = vmatpush1.bf16.msra.mxu0 %v2452
    %2501 = vmatprep.mubr.bf16.mxu0 %v2303
    %2502 = vmatmul.mubr.bf16.gmra.mrb[0].mxu0 %v2302
    %v2503 = vpop.f32.mrb[0].mxu0
    %v2504 = vadd.f32 %v2371, %v2503
    %v2505 = vpop.f32.mrb[0].mxu0
    %v2506 = vpop.f32.mrb[0].mxu0
    %v2507 = vadd.f32 %v2371, %v2506
    %v2508 = vpop.f32.mrb[0].mxu0
    %2509 = vmatprep.mubr.bf16.mxu0 %v2305
    %2510 = vmatmul.mubr.bf16.gmra.mrb[0].mxu0 %v2304
    %v2511 = vpop.f32.mrb[0].mxu0
    %v2512 = vadd.f32 %v2371, %v2511
    %v2513 = vpop.f32.mrb[0].mxu0
    %v2514 = vpop.f32.mrb[0].mxu0
    %v2515 = vadd.f32 %v2371, %v2514
    %v2516 = vpop.f32.mrb[0].mxu0
    %2517 = vmatprep.mubr.bf16.mxu0 %v2307
    %2518 = vmatmul.mubr.bf16.gmra.mrb[0].mxu0 %v2306
    %v2519 = vpop.f32.mrb[0].mxu0
    %v2520 = vadd.f32 %v2371, %v2519
    %v2521 = vpop.f32.mrb[0].mxu0
    %v2522 = vpop.f32.mrb[0].mxu0
    %v2523 = vadd.f32 %v2371, %v2522
    %v2524 = vpop.f32.mrb[0].mxu0
    %2525 = vmatprep.mubr.bf16.mxu0 %v2309
    %2526 = vmatmul.mubr.bf16.gmra.mrb[0].mxu0 %v2308
    %v2527 = vpop.f32.mrb[0].mxu0
    %v2528 = vadd.f32 %v2371, %v2527
    %v2529 = vpop.f32.mrb[0].mxu0
    %v2530 = vpop.f32.mrb[0].mxu0
    %v2531 = vadd.f32 %v2371, %v2530
    %v2532 = vpop.f32.mrb[0].mxu0
    %2533 = vmatprep.mubr.bf16.mxu0 %v2311
    %2534 = vmatmul.mubr.bf16.gmra.mrb[0].mxu0 %v2310
    %v2535 = vpop.f32.mrb[0].mxu0
    %v2536 = vadd.f32 %v2371, %v2535
    %v2537 = vpop.f32.mrb[0].mxu0
    %v2538 = vpop.f32.mrb[0].mxu0
    %v2539 = vadd.f32 %v2371, %v2538
    %v2540 = vpop.f32.mrb[0].mxu0
    %2541 = vmatprep.mubr.bf16.mxu0 %v2313
    %2542 = vmatmul.mubr.bf16.gmra.mrb[0].mxu0 %v2312
    %v2543 = vpop.f32.mrb[0].mxu0
    %v2544 = vadd.f32 %v2371, %v2543
    %v2545 = vpop.f32.mrb[0].mxu0
    %v2546 = vpop.f32.mrb[0].mxu0
    %v2547 = vadd.f32 %v2371, %v2546
    %v2548 = vpop.f32.mrb[0].mxu0
    %2549 = vmatprep.mubr.bf16.mxu0 %v2315
    %2550 = vmatmul.mubr.bf16.gmra.mrb[0].mxu0 %v2314
    %v2551 = vpop.f32.mrb[0].mxu0
    %v2552 = vadd.f32 %v2371, %v2551
    %v2553 = vpop.f32.mrb[0].mxu0
    %v2554 = vpop.f32.mrb[0].mxu0
    %v2555 = vadd.f32 %v2371, %v2554
    %v2556 = vpop.f32.mrb[0].mxu0
    %2557 = vmatprep.mubr.bf16.mxu0 %v2317
    %2558 = vmatmul.mubr.bf16.gmra.mrb[0].mxu0 %v2316
    %v2559 = vpop.f32.mrb[0].mxu0
    %v2560 = vadd.f32 %v2371, %v2559
    %v2561 = vpop.f32.mrb[0].mxu0
    %v2562 = vpop.f32.mrb[0].mxu0
    %v2563 = vadd.f32 %v2371, %v2562
    %v2564 = vpop.f32.mrb[0].mxu0
    %2565 = vmatprep.mubr.bf16.mxu0 %v2319
    %2566 = vmatmul.mubr.bf16.gmra.mrb[0].mxu0 %v2318
    %v2567 = vpop.f32.mrb[0].mxu0
    %v2568 = vadd.f32 %v2371, %v2567
    %v2569 = vpop.f32.mrb[0].mxu0
    %v2570 = vpop.f32.mrb[0].mxu0
    %v2571 = vadd.f32 %v2371, %v2570
    %v2572 = vpop.f32.mrb[0].mxu0
    %2573 = vmatprep.mubr.bf16.mxu0 %v2321
    %2574 = vmatmul.mubr.bf16.gmra.mrb[0].mxu0 %v2320
    %v2575 = vpop.f32.mrb[0].mxu0
    %v2576 = vadd.f32 %v2371, %v2575
    %v2577 = vpop.f32.mrb[0].mxu0
    %v2578 = vpop.f32.mrb[0].mxu0
    %v2579 = vadd.f32 %v2371, %v2578
    %v2580 = vpop.f32.mrb[0].mxu0
    %2581 = vmatprep.mubr.bf16.mxu0 %v2323
    %2582 = vmatmul.mubr.bf16.gmra.mrb[0].mxu0 %v2322
    %v2583 = vpop.f32.mrb[0].mxu0
    %v2584 = vadd.f32 %v2371, %v2583
    %v2585 = vpop.f32.mrb[0].mxu0
    %v2586 = vpop.f32.mrb[0].mxu0
    %v2587 = vadd.f32 %v2371, %v2586
    %v2588 = vpop.f32.mrb[0].mxu0
    %2589 = vmatprep.mubr.bf16.mxu0 %v2325
    %2590 = vmatmul.mubr.bf16.gmra.mrb[0].mxu0 %v2324
    %v2591 = vpop.f32.mrb[0].mxu0
    %v2592 = vadd.f32 %v2371, %v2591
    %v2593 = vpop.f32.mrb[0].mxu0
    %v2594 = vpop.f32.mrb[0].mxu0
    %v2595 = vadd.f32 %v2371, %v2594
    %v2596 = vpop.f32.mrb[0].mxu0
    %2597 = vmatprep.mubr.bf16.mxu0 %v2327
    %2598 = vmatmul.mubr.bf16.gmra.mrb[0].mxu0 %v2326
    %v2599 = vpop.f32.mrb[0].mxu0
    %v2600 = vadd.f32 %v2371, %v2599
    %v2601 = vpop.f32.mrb[0].mxu0
    %v2602 = vpop.f32.mrb[0].mxu0
    %v2603 = vadd.f32 %v2371, %v2602
    %v2604 = vpop.f32.mrb[0].mxu0
    %2605 = vmatprep.mubr.bf16.mxu0 %v2329
    %2606 = vmatmul.mubr.bf16.gmra.mrb[0].mxu0 %v2328
    %v2607 = vpop.f32.mrb[0].mxu0
    %v2608 = vadd.f32 %v2371, %v2607
    %v2609 = vpop.f32.mrb[0].mxu0
    %v2610 = vpop.f32.mrb[0].mxu0
    %v2611 = vadd.f32 %v2371, %v2610
    %v2612 = vpop.f32.mrb[0].mxu0
    %2613 = vmatprep.mubr.bf16.mxu0 %v2331
    %2614 = vmatmul.mubr.bf16.gmra.mrb[0].mxu0 %v2330
    %v2615 = vpop.f32.mrb[0].mxu0
    %v2616 = vadd.f32 %v2371, %v2615
    %v2617 = vpop.f32.mrb[0].mxu0
    %v2618 = vpop.f32.mrb[0].mxu0
    %v2619 = vadd.f32 %v2371, %v2618
    %v2620 = vpop.f32.mrb[0].mxu0
    %2621 = vmatprep.mubr.bf16.mxu0 %v2333
    %2622 = vmatmul.mubr.bf16.gmra.mrb[0].mxu0 %v2332
    %v2623 = vpop.f32.mrb[0].mxu0
    %v2624 = vadd.f32 %v2371, %v2623
    %v2625 = vpop.f32.mrb[0].mxu0
    %v2626 = vpop.f32.mrb[0].mxu0
    %v2627 = vadd.f32 %v2371, %v2626
    %v2628 = vpop.f32.mrb[0].mxu0
    %2629 = vdwg.mxu0
    %2630 = vst [vmem:[%s9] sm:$0xff] %v2504
    %2631 = vst [vmem:[%s9 + $0x8] sm:$0xff] %v2507
    %2632 = vst [vmem:[%s9 + $0x10] sm:$0xff] %v2512
    %2633 = vst [vmem:[%s9 + $0x18] sm:$0xff] %v2515
    %2634 = vst [vmem:[%s9 + $0x20] sm:$0xff] %v2520
    %2635 = vst [vmem:[%s9 + $0x28] sm:$0xff] %v2523
    %2636 = vst [vmem:[%s9 + $0x30] sm:$0xff] %v2528
    %2637 = vst [vmem:[%s9 + $0x38] sm:$0xff] %v2531
    %2638 = vst [vmem:[%s9 + $0x40] sm:$0xff] %v2536
    %2639 = vst [vmem:[%s9 + $0x48] sm:$0xff] %v2539
    %2640 = vst [vmem:[%s9 + $0x50] sm:$0xff] %v2544
    %2641 = vst [vmem:[%s9 + $0x58] sm:$0xff] %v2547
    %2642 = vst [vmem:[%s9 + $0x60] sm:$0xff] %v2552
    %2643 = vst [vmem:[%s9 + $0x68] sm:$0xff] %v2555
    %2644 = vst [vmem:[%s9 + $0x70] sm:$0xff] %v2560
    %2645 = vst [vmem:[%s9 + $0x78] sm:$0xff] %v2563
    %2646 = vst [vmem:[%s9 + $0x80] sm:$0xff] %v2568
    %2647 = vst [vmem:[%s9 + $0x88] sm:$0xff] %v2571
    %2648 = vst [vmem:[%s9 + $0x90] sm:$0xff] %v2576
    %2649 = vst [vmem:[%s9 + $0x98] sm:$0xff] %v2579
    %2650 = vst [vmem:[%s9 + $0xa0] sm:$0xff] %v2584
    %2651 = vst [vmem:[%s9 + $0xa8] sm:$0xff] %v2587
    %2652 = vst [vmem:[%s9 + $0xb0] sm:$0xff] %v2592
    %2653 = vst [vmem:[%s9 + $0xb8] sm:$0xff] %v2595
    %2654 = vst [vmem:[%s9 + $0xc0] sm:$0xff] %v2600
    %2655 = vst [vmem:[%s9 + $0xc8] sm:$0xff] %v2603
    %2656 = vst [vmem:[%s9 + $0xd0] sm:$0xff] %v2608
    %2657 = vst [vmem:[%s9 + $0xd8] sm:$0xff] %v2611
    %2658 = vst [vmem:[%s9 + $0xe0] sm:$0xff] %v2616
    %2659 = vst [vmem:[%s9 + $0xe8] sm:$0xff] %v2619
    %2660 = vst [vmem:[%s9 + $0xf0] sm:$0xff] %v2624
    %2661 = vst [vmem:[%s9 + $0xf8] sm:$0xff] %v2627
    // Predicated region
    $region46: #{inverse_model_forward.1} parent=1 // pred_check
      _
    $region47: #{inverse_model_forward.1} parent=1 // pred_check_branch
      %2663 = sbr.rel (0) target = $region49
    $region48: #{inverse_model_forward.1} parent=1 // pred_region
      _
    $region49: #{inverse_model_forward.1} parent=1 // pred_fallthru
      _
    // Predicated region
    $region50: #{inverse_model_forward.1} parent=1 // pred_check
      _
    $region51: #{inverse_model_forward.1} parent=1 // pred_check_branch
      %2665 = sbr.rel (0) target = $region53
    $region52: #{inverse_model_forward.1} parent=1 // pred_region
      _
    $region53: #{inverse_model_forward.1} parent=1 // pred_fallthru
      _
    %2666 = vsyncpa [#allocation3], 1
    %2667 = vsyncpa [#allocation5], 1

</llo_original>
